<compile_context>
chip_gen: v5e
topology: v5e:2x2
jax: 0.10.0
libtpu: 0.0.40
codegen_flags: <defaults>
</compile_context>

<pallas_src>
import functools
from math import sqrt

import jax
import jax.numpy as jnp
from jax.experimental import pallas as pl
from jax.experimental.pallas import tpu as pltpu


def _mattention_kernel(x_ref, wq_ref, wk_ref, wv_ref, wo_ref, o_ref, acc_ref,
                       *, heads, dim_head, slices, tokens):
    """One grid step processes `slices` (b, p) groups of `tokens` tokens.

    x_ref:   (slices*tokens, D)     token rows for this tile (native dtype)
    wq_ref:  (heads, D, dim_head)   per-head Q weight (softmax scale pre-folded)
    wk_ref:  (heads, D, dim_head)   per-head K weight
    wv_ref:  (heads, D, dim_head)   per-head V weight
    wo_ref:  (heads, dim_head, D)   per-head block of the output projection
    o_ref:   (slices*tokens, D)
    acc_ref: (slices*tokens, D) f32 VMEM scratch accumulator
    """
    rows = slices * tokens
    x = x_ref[...]  # load once; native dtype (bf16 fast path) -> MXU, f32 accumulation below

    for h in range(heads):  # unrolled; head chains are independent -> Mosaic can interleave
        # Per-head projections straight from per-head weight stacks: leading-axis ref
        # indexing is a free view, so there is no column slicing of a fused qkv activation.
        q = jnp.dot(x, wq_ref[h], preferred_element_type=jnp.float32).astype(x.dtype)
        k = jnp.dot(x, wk_ref[h], preferred_element_type=jnp.float32).astype(x.dtype)
        v = jnp.dot(x, wv_ref[h], preferred_element_type=jnp.float32).astype(x.dtype)

        # Split only the leading (sublane) dim; last dim untouched -> no lane relayout.
        q = q.reshape(slices, tokens, dim_head)
        k = k.reshape(slices, tokens, dim_head)
        v = v.reshape(slices, tokens, dim_head)

        # Scale already folded into wq (wrapper-side), so no extra (N, N) multiply.
        s = jnp.einsum('bnd,bmd->bnm', q, k, preferred_element_type=jnp.float32)
        s = s - jnp.max(s, axis=-1, keepdims=True)            # stable softmax, f32
        e = jnp.exp(s)
        p = e * pl.reciprocal(jnp.sum(e, axis=-1, keepdims=True), approx=True)

        ctx = jnp.einsum('bnm,bmd->bnd', p.astype(v.dtype), v,
                         preferred_element_type=jnp.float32)   # (slices, tokens, dh)

        # Per-head block of the output projection; accumulate through VMEM scratch so the
        # f32 (rows, D) accumulator never has to live (and spill) in vregs.
        part = jnp.dot(ctx.reshape(rows, dim_head).astype(x.dtype), wo_ref[h],
                       preferred_element_type=jnp.float32)
        if h == 0:
            acc_ref[...] = part
        else:
            acc_ref[...] += part

    # TODO(synk): if v5e masked 32-lane stores ever bind, present a lane-dense (BP, N*D)
    # output view from the wrapper; at D=32, N=8 the in-kernel sublane->lane relayout
    # costs more than the masked store.
    o_ref[...] = acc_ref[...].astype(o_ref.dtype)


def _choose_slices_per_step(num_slices, tokens, *, max_rows=512):
    """Pick how many (b, p) slices to batch per grid step.

    Targets: (a) >= 2 grid steps whenever possible, so the BlockSpec pipeline can overlap
    DMA with compute and the "parallel" grid axis can be spread over v7x's two TensorCores;
    (b) <= ~max_rows token rows per step (512-row tiles already sit near the HBM roofline,
    and smaller tiles cut vreg/VMEM pressure from the f32 intermediates);
    (c) the (8, 128) tiling rule (block rows % 8 == 0, or the block equals the full array).
    Falls back to a single full block only when no valid divisor exists.
    """
    def valid(tb):
        rows = tb * tokens
        return num_slices % tb == 0 and (rows % 8 == 0 or tb == num_slices)

    start = min(num_slices, max(1, max_rows // tokens))
    single_block_fallback = None
    for tb in range(start, 0, -1):
        if not valid(tb):
            continue
        if num_slices // tb >= 2:
            return tb
        if single_block_fallback is None:
            single_block_fallback = tb
    return single_block_fallback if single_block_fallback is not None else num_slices


def mattention(x, wqkv, wout, *, heads, dim_head):
    """x: (B, P, N, D); wqkv: (D, 3*heads*dim_head); wout: (heads*dim_head, D)."""
    B, P, N, D = x.shape
    inner = heads * dim_head
    BP = B * P

    # Fold the 1/sqrt(dim_head) softmax scale into the Q weight (zero-cost constant
    # transform), then pre-split all weights per head so the kernel never slices lanes.
    scale = dim_head ** -0.5
    wq = (wqkv[:, :inner] * scale).reshape(D, heads, dim_head).transpose(1, 0, 2)
    wk = wqkv[:, inner:2 * inner].reshape(D, heads, dim_head).transpose(1, 0, 2)
    wv = wqkv[:, 2 * inner:].reshape(D, heads, dim_head).transpose(1, 0, 2)
    wo = wout.reshape(heads, dim_head, D)

    tb = _choose_slices_per_step(BP, N)
    rows = tb * N
    grid = (BP // tb,)
    xf = x.reshape(BP * N, D)

    # Explicit VMEM budget (re-derived for v7x's 64 MiB physical VMEM): double-buffered
    # x/out blocks + double-buffered weights + f32 scratch, with 4x headroom for in-kernel
    # f32 intermediates and compiler temporaries.
    itemsize = jnp.dtype(x.dtype).itemsize
    block_bytes = rows * D * itemsize
    weight_bytes = (3 * heads * D * dim_head + heads * dim_head * D) * itemsize
    vmem_estimate = 4 * (2 * 2 * block_bytes + 2 * weight_bytes + rows * D * 4)
    vmem_limit = int(min(32 * 1024 * 1024, max(vmem_estimate, 16 * 1024 * 1024)))

    kernel = functools.partial(_mattention_kernel, heads=heads, dim_head=dim_head,
                               slices=tb, tokens=N)

    out = pl.pallas_call(
        kernel,
        out_shape=jax.ShapeDtypeStruct((BP * N, D), x.dtype),
        grid_spec=pltpu.PrefetchScalarGridSpec(
            num_scalar_prefetch=0,
            grid=grid,
            in_specs=[
                pl.BlockSpec((rows, D), lambda i: (i, 0)),
                # Constant index_maps -> weights fetched once and kept VMEM-resident.
                pl.BlockSpec((heads, D, dim_head), lambda i: (0, 0, 0)),
                pl.BlockSpec((heads, D, dim_head), lambda i: (0, 0, 0)),
                pl.BlockSpec((heads, D, dim_head), lambda i: (0, 0, 0)),
                pl.BlockSpec((heads, dim_head, D), lambda i: (0, 0, 0)),
            ],
            out_specs=pl.BlockSpec((rows, D), lambda i: (i, 0)),
            scratch_shapes=[pltpu.VMEM((rows, D), jnp.float32)],
        ),
        compiler_params=pltpu.CompilerParams(
            dimension_semantics=("parallel",),
            vmem_limit_bytes=vmem_limit),
    )(xf, wq, wk, wv, wo)
    return out.reshape(B, P, N, D)


def mattention_ref(x, wqkv, wout, *, heads, dim_head):
    """Pure-JAX reference replicating the PyTorch forward semantics (f32 math)."""
    B, P, N, D = x.shape
    inner = heads * dim_head
    scale = dim_head ** (-0.5)
    qkv = jnp.einsum('bpnd,de->bpne', x, wqkv)
    q, k, v = jnp.split(qkv, 3, axis=-1)

    def split_heads(t):  # b p n (h d) -> b p h n d
        return t.reshape(B, P, N, heads, dim_head).transpose(0, 1, 3, 2, 4)

    q, k, v = map(split_heads, (q, k, v))
    dots = jnp.einsum('bphnd,bphmd->bphnm', q, k) * scale
    attn = jax.nn.softmax(dots, axis=-1)
    out = jnp.einsum('bphnm,bphmd->bphnd', attn, v)
    out = out.transpose(0, 1, 3, 2, 4).reshape(B, P, N, inner)
    return jnp.einsum('bpni,id->bpnd', out, wout)


if __name__ == "__main__":
    B, P, N, D = 2, 2, 8, 32
    HEADS, DIM_HEAD = 4, 8
    INNER = HEADS * DIM_HEAD

    key = jax.random.PRNGKey(0)
    kx, kq, ko = jax.random.split(key, 3)

    x = jax.random.normal(kx, (B, P, N, D), dtype=jnp.float32)
    # Deterministic synthetic weights (PyTorch-like uniform init scale), stored (in, out).
    wqkv = jax.random.uniform(kq, (D, 3 * INNER), dtype=jnp.float32,
                              minval=-1.0 / sqrt(D), maxval=1.0 / sqrt(D))
    wout = jax.random.uniform(ko, (INNER, D), dtype=jnp.float32,
                              minval=-1.0 / sqrt(INNER), maxval=1.0 / sqrt(INNER))

    # --- f32 operand path ---
    out = jax.block_until_ready(mattention(x, wqkv, wout, heads=HEADS, dim_head=DIM_HEAD))
    ref = mattention_ref(x, wqkv, wout, heads=HEADS, dim_head=DIM_HEAD)
    assert out.shape == (B, P, N, D)
    # Tolerance slightly looser than exact division: the softmax denominator uses the
    # hardware approximate reciprocal (relative error, covered by rtol).
    assert jnp.allclose(out, ref, atol=1e-2, rtol=1e-2), "f32 mismatch vs reference"

    # --- bf16 operand path (native MXU dtype; f32 accumulation inside the kernel) ---
    xb, wqb, wob = (t.astype(jnp.bfloat16) for t in (x, wqkv, wout))
    out_bf = jax.block_until_ready(mattention(xb, wqb, wob, heads=HEADS, dim_head=DIM_HEAD))
    ref_bf = mattention_ref(xb.astype(jnp.float32), wqb.astype(jnp.float32),
                            wob.astype(jnp.float32), heads=HEADS, dim_head=DIM_HEAD)
    assert jnp.allclose(out_bf.astype(jnp.float32), ref_bf, atol=2e-1, rtol=5e-2), \
        "bf16 mismatch vs reference"

    print("KERNEL_OK")
</pallas_src>

<mosaic_0001>
module attributes {stable_mosaic.version = 11 : i64} {
  func.func @_mattention_kernel(%arg0: i32, %arg1: memref<16x32xf32, #tpu.memory_space<vmem>>, %arg2: memref<4x32x8xf32, #tpu.memory_space<vmem>>, %arg3: memref<4x32x8xf32, #tpu.memory_space<vmem>>, %arg4: memref<4x32x8xf32, #tpu.memory_space<vmem>>, %arg5: memref<4x8x32xf32, #tpu.memory_space<vmem>>, %arg6: memref<16x32xf32, #tpu.memory_space<vmem>>, %arg7: memref<16x32xf32, #tpu.memory_space<vmem>>) attributes {dimension_semantics = [#tpu.dimension_semantics<parallel>], iteration_bounds = array<i64: 2>, scalar_prefetch = 0 : i64, scratch_operands = 1 : i64, tpu.core_type = #tpu.core_type<tc>, window_params = [{transform_indices = @transform_0, window_bounds = array<i64: 16, 32>}, {pipeline_mode = #tpu.pipeline_mode<synchronous>, transform_indices = @transform_1, window_bounds = array<i64: 4, 32, 8>}, {pipeline_mode = #tpu.pipeline_mode<synchronous>, transform_indices = @transform_2, window_bounds = array<i64: 4, 32, 8>}, {pipeline_mode = #tpu.pipeline_mode<synchronous>, transform_indices = @transform_3, window_bounds = array<i64: 4, 32, 8>}, {pipeline_mode = #tpu.pipeline_mode<synchronous>, transform_indices = @transform_4, window_bounds = array<i64: 4, 8, 32>}, {transform_indices = @transform_5, window_bounds = array<i64: 16, 32>}]} {
    %c0 = arith.constant 0 : index
    %c0_0 = arith.constant 0 : index
    %0 = vector.load %arg1[%c0, %c0_0] : memref<16x32xf32, #tpu.memory_space<vmem>>, vector<16x32xf32>
    %c0_1 = arith.constant 0 : index
    %c0_2 = arith.constant 0 : index
    %c0_3 = arith.constant 0 : index
    %1 = vector.load %arg2[%c0_1, %c0_2, %c0_3] : memref<4x32x8xf32, #tpu.memory_space<vmem>>, vector<1x32x8xf32>
    %2 = vector.shape_cast %1 : vector<1x32x8xf32> to vector<32x8xf32>
    %cst = arith.constant dense<0.000000e+00> : vector<16x8xf32>
    %3 = tpu.matmul %0, %2, %cst {dimension_numbers = #tpu.dot_dimension_numbers<[1], [0], [0], [1], [0, 0, 1, 1], [], []>} : vector<16x32xf32>, vector<32x8xf32>, vector<16x8xf32> -> vector<16x8xf32>
    %c0_4 = arith.constant 0 : index
    %c0_5 = arith.constant 0 : index
    %c0_6 = arith.constant 0 : index
    %4 = vector.load %arg3[%c0_4, %c0_5, %c0_6] : memref<4x32x8xf32, #tpu.memory_space<vmem>>, vector<1x32x8xf32>
    %5 = vector.shape_cast %4 : vector<1x32x8xf32> to vector<32x8xf32>
    %cst_7 = arith.constant dense<0.000000e+00> : vector<16x8xf32>
    %6 = tpu.matmul %0, %5, %cst_7 {dimension_numbers = #tpu.dot_dimension_numbers<[1], [0], [0], [1], [0, 0, 1, 1], [], []>} : vector<16x32xf32>, vector<32x8xf32>, vector<16x8xf32> -> vector<16x8xf32>
    %c0_8 = arith.constant 0 : index
    %c0_9 = arith.constant 0 : index
    %c0_10 = arith.constant 0 : index
    %7 = vector.load %arg4[%c0_8, %c0_9, %c0_10] : memref<4x32x8xf32, #tpu.memory_space<vmem>>, vector<1x32x8xf32>
    %8 = vector.shape_cast %7 : vector<1x32x8xf32> to vector<32x8xf32>
    %cst_11 = arith.constant dense<0.000000e+00> : vector<16x8xf32>
    %9 = tpu.matmul %0, %8, %cst_11 {dimension_numbers = #tpu.dot_dimension_numbers<[1], [0], [0], [1], [0, 0, 1, 1], [], []>} : vector<16x32xf32>, vector<32x8xf32>, vector<16x8xf32> -> vector<16x8xf32>
    %10 = vector.shape_cast %3 : vector<16x8xf32> to vector<2x8x8xf32>
    %11 = vector.shape_cast %6 : vector<16x8xf32> to vector<2x8x8xf32>
    %12 = vector.shape_cast %9 : vector<16x8xf32> to vector<2x8x8xf32>
    "tpu.trace_start"() <{level = 10 : i32, message = "bnd,bmd->bnm"}> : () -> ()
    %cst_12 = arith.constant dense<0.000000e+00> : vector<2x8x8xf32>
    %13 = tpu.matmul %10, %11, %cst_12 {dimension_numbers = #tpu.dot_dimension_numbers<[2], [2], [1], [1], [0, 0, 0, 1, 1, 1], [0], [0]>} : vector<2x8x8xf32>, vector<2x8x8xf32>, vector<2x8x8xf32> -> vector<2x8x8xf32>
    "tpu.trace_stop"() : () -> ()
    %cst_13 = arith.constant dense<0xFF800000> : vector<2x8xf32>
    %14 = vector.multi_reduction <maximumf>, %13, %cst_13 [2] : vector<2x8x8xf32> to vector<2x8xf32>
    %15 = vector.shape_cast %14 : vector<2x8xf32> to vector<2x8x1xf32>
    %16 = vector.broadcast %15 : vector<2x8x1xf32> to vector<2x8x8xf32>
    %17 = arith.subf %13, %16 : vector<2x8x8xf32>
    %18 = math.exp %17 : vector<2x8x8xf32>
    %cst_14 = arith.constant dense<0.000000e+00> : vector<2x8xf32>
    %19 = vector.multi_reduction <add>, %18, %cst_14 [2] : vector<2x8x8xf32> to vector<2x8xf32>
    %20 = vector.shape_cast %19 : vector<2x8xf32> to vector<2x8x1xf32>
    %21 = tpu.reciprocal %20 {approx = true} : vector<2x8x1xf32> -> vector<2x8x1xf32>
    %22 = vector.broadcast %21 : vector<2x8x1xf32> to vector<2x8x8xf32>
    %23 = arith.mulf %18, %22 : vector<2x8x8xf32>
    "tpu.trace_start"() <{level = 10 : i32, message = "bnm,bmd->bnd"}> : () -> ()
    %cst_15 = arith.constant dense<0.000000e+00> : vector<2x8x8xf32>
    %24 = tpu.matmul %23, %12, %cst_15 {dimension_numbers = #tpu.dot_dimension_numbers<[2], [1], [1], [2], [0, 0, 0, 1, 1, 2], [0], [0]>} : vector<2x8x8xf32>, vector<2x8x8xf32>, vector<2x8x8xf32> -> vector<2x8x8xf32>
    "tpu.trace_stop"() : () -> ()
    %25 = vector.shape_cast %24 : vector<2x8x8xf32> to vector<16x8xf32>
    %c0_16 = arith.constant 0 : index
    %c0_17 = arith.constant 0 : index
    %c0_18 = arith.constant 0 : index
    %26 = vector.load %arg5[%c0_16, %c0_17, %c0_18] : memref<4x8x32xf32, #tpu.memory_space<vmem>>, vector<1x8x32xf32>
    %27 = vector.shape_cast %26 : vector<1x8x32xf32> to vector<8x32xf32>
    %cst_19 = arith.constant dense<0.000000e+00> : vector<16x32xf32>
    %28 = tpu.matmul %25, %27, %cst_19 {dimension_numbers = #tpu.dot_dimension_numbers<[1], [0], [0], [1], [0, 0, 1, 1], [], []>} : vector<16x8xf32>, vector<8x32xf32>, vector<16x32xf32> -> vector<16x32xf32>
    %c0_20 = arith.constant 0 : index
    %c0_21 = arith.constant 0 : index
    %29 = vector.load %arg7[%c0_20, %c0_21] : memref<16x32xf32, #tpu.memory_space<vmem>>, vector<16x32xf32>
    tpu.vector_store %arg7[%c0_20, %c0_21], %28 {strides = array<i32>} : memref<16x32xf32, #tpu.memory_space<vmem>>, vector<16x32xf32>,
    %c1 = arith.constant 1 : index
    %c0_22 = arith.constant 0 : index
    %c0_23 = arith.constant 0 : index
    %30 = vector.load %arg2[%c1, %c0_22, %c0_23] : memref<4x32x8xf32, #tpu.memory_space<vmem>>, vector<1x32x8xf32>
    %31 = vector.shape_cast %30 : vector<1x32x8xf32> to vector<32x8xf32>
    %cst_24 = arith.constant dense<0.000000e+00> : vector<16x8xf32>
    %32 = tpu.matmul %0, %31, %cst_24 {dimension_numbers = #tpu.dot_dimension_numbers<[1], [0], [0], [1], [0, 0, 1, 1], [], []>} : vector<16x32xf32>, vector<32x8xf32>, vector<16x8xf32> -> vector<16x8xf32>
    %c1_25 = arith.constant 1 : index
    %c0_26 = arith.constant 0 : index
    %c0_27 = arith.constant 0 : index
    %33 = vector.load %arg3[%c1_25, %c0_26, %c0_27] : memref<4x32x8xf32, #tpu.memory_space<vmem>>, vector<1x32x8xf32>
    %34 = vector.shape_cast %33 : vector<1x32x8xf32> to vector<32x8xf32>
    %cst_28 = arith.constant dense<0.000000e+00> : vector<16x8xf32>
    %35 = tpu.matmul %0, %34, %cst_28 {dimension_numbers = #tpu.dot_dimension_numbers<[1], [0], [0], [1], [0, 0, 1, 1], [], []>} : vector<16x32xf32>, vector<32x8xf32>, vector<16x8xf32> -> vector<16x8xf32>
    %c1_29 = arith.constant 1 : index
    %c0_30 = arith.constant 0 : index
    %c0_31 = arith.constant 0 : index
    %36 = vector.load %arg4[%c1_29, %c0_30, %c0_31] : memref<4x32x8xf32, #tpu.memory_space<vmem>>, vector<1x32x8xf32>
    %37 = vector.shape_cast %36 : vector<1x32x8xf32> to vector<32x8xf32>
    %cst_32 = arith.constant dense<0.000000e+00> : vector<16x8xf32>
    %38 = tpu.matmul %0, %37, %cst_32 {dimension_numbers = #tpu.dot_dimension_numbers<[1], [0], [0], [1], [0, 0, 1, 1], [], []>} : vector<16x32xf32>, vector<32x8xf32>, vector<16x8xf32> -> vector<16x8xf32>
    %39 = vector.shape_cast %32 : vector<16x8xf32> to vector<2x8x8xf32>
    %40 = vector.shape_cast %35 : vector<16x8xf32> to vector<2x8x8xf32>
    %41 = vector.shape_cast %38 : vector<16x8xf32> to vector<2x8x8xf32>
    "tpu.trace_start"() <{level = 10 : i32, message = "bnd,bmd->bnm"}> : () -> ()
    %cst_33 = arith.constant dense<0.000000e+00> : vector<2x8x8xf32>
    %42 = tpu.matmul %39, %40, %cst_33 {dimension_numbers = #tpu.dot_dimension_numbers<[2], [2], [1], [1], [0, 0, 0, 1, 1, 1], [0], [0]>} : vector<2x8x8xf32>, vector<2x8x8xf32>, vector<2x8x8xf32> -> vector<2x8x8xf32>
    "tpu.trace_stop"() : () -> ()
    %cst_34 = arith.constant dense<0xFF800000> : vector<2x8xf32>
    %43 = vector.multi_reduction <maximumf>, %42, %cst_34 [2] : vector<2x8x8xf32> to vector<2x8xf32>
    %44 = vector.shape_cast %43 : vector<2x8xf32> to vector<2x8x1xf32>
    %45 = vector.broadcast %44 : vector<2x8x1xf32> to vector<2x8x8xf32>
    %46 = arith.subf %42, %45 : vector<2x8x8xf32>
    %47 = math.exp %46 : vector<2x8x8xf32>
    %cst_35 = arith.constant dense<0.000000e+00> : vector<2x8xf32>
    %48 = vector.multi_reduction <add>, %47, %cst_35 [2] : vector<2x8x8xf32> to vector<2x8xf32>
    %49 = vector.shape_cast %48 : vector<2x8xf32> to vector<2x8x1xf32>
    %50 = tpu.reciprocal %49 {approx = true} : vector<2x8x1xf32> -> vector<2x8x1xf32>
    %51 = vector.broadcast %50 : vector<2x8x1xf32> to vector<2x8x8xf32>
    %52 = arith.mulf %47, %51 : vector<2x8x8xf32>
    "tpu.trace_start"() <{level = 10 : i32, message = "bnm,bmd->bnd"}> : () -> ()
    %cst_36 = arith.constant dense<0.000000e+00> : vector<2x8x8xf32>
    %53 = tpu.matmul %52, %41, %cst_36 {dimension_numbers = #tpu.dot_dimension_numbers<[2], [1], [1], [2], [0, 0, 0, 1, 1, 2], [0], [0]>} : vector<2x8x8xf32>, vector<2x8x8xf32>, vector<2x8x8xf32> -> vector<2x8x8xf32>
    "tpu.trace_stop"() : () -> ()
    %54 = vector.shape_cast %53 : vector<2x8x8xf32> to vector<16x8xf32>
    %c1_37 = arith.constant 1 : index
    %c0_38 = arith.constant 0 : index
    %c0_39 = arith.constant 0 : index
    %55 = vector.load %arg5[%c1_37, %c0_38, %c0_39] : memref<4x8x32xf32, #tpu.memory_space<vmem>>, vector<1x8x32xf32>
    %56 = vector.shape_cast %55 : vector<1x8x32xf32> to vector<8x32xf32>
    %cst_40 = arith.constant dense<0.000000e+00> : vector<16x32xf32>
    %57 = tpu.matmul %54, %56, %cst_40 {dimension_numbers = #tpu.dot_dimension_numbers<[1], [0], [0], [1], [0, 0, 1, 1], [], []>} : vector<16x8xf32>, vector<8x32xf32>, vector<16x32xf32> -> vector<16x32xf32>
    %c0_41 = arith.constant 0 : index
    %c0_42 = arith.constant 0 : index
    %58 = vector.load %arg7[%c0_41, %c0_42] : memref<16x32xf32, #tpu.memory_space<vmem>>, vector<16x32xf32>
    %59 = arith.addf %58, %57 : vector<16x32xf32>
    %c0_43 = arith.constant 0 : index
    %c0_44 = arith.constant 0 : index
    %60 = vector.load %arg7[%c0_43, %c0_44] : memref<16x32xf32, #tpu.memory_space<vmem>>, vector<16x32xf32>
    tpu.vector_store %arg7[%c0_43, %c0_44], %59 {strides = array<i32>} : memref<16x32xf32, #tpu.memory_space<vmem>>, vector<16x32xf32>,
    %c2 = arith.constant 2 : index
    %c0_45 = arith.constant 0 : index
    %c0_46 = arith.constant 0 : index
    %61 = vector.load %arg2[%c2, %c0_45, %c0_46] : memref<4x32x8xf32, #tpu.memory_space<vmem>>, vector<1x32x8xf32>
    %62 = vector.shape_cast %61 : vector<1x32x8xf32> to vector<32x8xf32>
    %cst_47 = arith.constant dense<0.000000e+00> : vector<16x8xf32>
    %63 = tpu.matmul %0, %62, %cst_47 {dimension_numbers = #tpu.dot_dimension_numbers<[1], [0], [0], [1], [0, 0, 1, 1], [], []>} : vector<16x32xf32>, vector<32x8xf32>, vector<16x8xf32> -> vector<16x8xf32>
    %c2_48 = arith.constant 2 : index
    %c0_49 = arith.constant 0 : index
    %c0_50 = arith.constant 0 : index
    %64 = vector.load %arg3[%c2_48, %c0_49, %c0_50] : memref<4x32x8xf32, #tpu.memory_space<vmem>>, vector<1x32x8xf32>
    %65 = vector.shape_cast %64 : vector<1x32x8xf32> to vector<32x8xf32>
    %cst_51 = arith.constant dense<0.000000e+00> : vector<16x8xf32>
    %66 = tpu.matmul %0, %65, %cst_51 {dimension_numbers = #tpu.dot_dimension_numbers<[1], [0], [0], [1], [0, 0, 1, 1], [], []>} : vector<16x32xf32>, vector<32x8xf32>, vector<16x8xf32> -> vector<16x8xf32>
    %c2_52 = arith.constant 2 : index
    %c0_53 = arith.constant 0 : index
    %c0_54 = arith.constant 0 : index
    %67 = vector.load %arg4[%c2_52, %c0_53, %c0_54] : memref<4x32x8xf32, #tpu.memory_space<vmem>>, vector<1x32x8xf32>
    %68 = vector.shape_cast %67 : vector<1x32x8xf32> to vector<32x8xf32>
    %cst_55 = arith.constant dense<0.000000e+00> : vector<16x8xf32>
    %69 = tpu.matmul %0, %68, %cst_55 {dimension_numbers = #tpu.dot_dimension_numbers<[1], [0], [0], [1], [0, 0, 1, 1], [], []>} : vector<16x32xf32>, vector<32x8xf32>, vector<16x8xf32> -> vector<16x8xf32>
    %70 = vector.shape_cast %63 : vector<16x8xf32> to vector<2x8x8xf32>
    %71 = vector.shape_cast %66 : vector<16x8xf32> to vector<2x8x8xf32>
    %72 = vector.shape_cast %69 : vector<16x8xf32> to vector<2x8x8xf32>
    "tpu.trace_start"() <{level = 10 : i32, message = "bnd,bmd->bnm"}> : () -> ()
    %cst_56 = arith.constant dense<0.000000e+00> : vector<2x8x8xf32>
    %73 = tpu.matmul %70, %71, %cst_56 {dimension_numbers = #tpu.dot_dimension_numbers<[2], [2], [1], [1], [0, 0, 0, 1, 1, 1], [0], [0]>} : vector<2x8x8xf32>, vector<2x8x8xf32>, vector<2x8x8xf32> -> vector<2x8x8xf32>
    "tpu.trace_stop"() : () -> ()
    %cst_57 = arith.constant dense<0xFF800000> : vector<2x8xf32>
    %74 = vector.multi_reduction <maximumf>, %73, %cst_57 [2] : vector<2x8x8xf32> to vector<2x8xf32>
    %75 = vector.shape_cast %74 : vector<2x8xf32> to vector<2x8x1xf32>
    %76 = vector.broadcast %75 : vector<2x8x1xf32> to vector<2x8x8xf32>
    %77 = arith.subf %73, %76 : vector<2x8x8xf32>
    %78 = math.exp %77 : vector<2x8x8xf32>
    %cst_58 = arith.constant dense<0.000000e+00> : vector<2x8xf32>
    %79 = vector.multi_reduction <add>, %78, %cst_58 [2] : vector<2x8x8xf32> to vector<2x8xf32>
    %80 = vector.shape_cast %79 : vector<2x8xf32> to vector<2x8x1xf32>
    %81 = tpu.reciprocal %80 {approx = true} : vector<2x8x1xf32> -> vector<2x8x1xf32>
    %82 = vector.broadcast %81 : vector<2x8x1xf32> to vector<2x8x8xf32>
    %83 = arith.mulf %78, %82 : vector<2x8x8xf32>
    "tpu.trace_start"() <{level = 10 : i32, message = "bnm,bmd->bnd"}> : () -> ()
    %cst_59 = arith.constant dense<0.000000e+00> : vector<2x8x8xf32>
    %84 = tpu.matmul %83, %72, %cst_59 {dimension_numbers = #tpu.dot_dimension_numbers<[2], [1], [1], [2], [0, 0, 0, 1, 1, 2], [0], [0]>} : vector<2x8x8xf32>, vector<2x8x8xf32>, vector<2x8x8xf32> -> vector<2x8x8xf32>
    "tpu.trace_stop"() : () -> ()
    %85 = vector.shape_cast %84 : vector<2x8x8xf32> to vector<16x8xf32>
    %c2_60 = arith.constant 2 : index
    %c0_61 = arith.constant 0 : index
    %c0_62 = arith.constant 0 : index
    %86 = vector.load %arg5[%c2_60, %c0_61, %c0_62] : memref<4x8x32xf32, #tpu.memory_space<vmem>>, vector<1x8x32xf32>
    %87 = vector.shape_cast %86 : vector<1x8x32xf32> to vector<8x32xf32>
    %cst_63 = arith.constant dense<0.000000e+00> : vector<16x32xf32>
    %88 = tpu.matmul %85, %87, %cst_63 {dimension_numbers = #tpu.dot_dimension_numbers<[1], [0], [0], [1], [0, 0, 1, 1], [], []>} : vector<16x8xf32>, vector<8x32xf32>, vector<16x32xf32> -> vector<16x32xf32>
    %c0_64 = arith.constant 0 : index
    %c0_65 = arith.constant 0 : index
    %89 = vector.load %arg7[%c0_64, %c0_65] : memref<16x32xf32, #tpu.memory_space<vmem>>, vector<16x32xf32>
    %90 = arith.addf %89, %88 : vector<16x32xf32>
    %c0_66 = arith.constant 0 : index
    %c0_67 = arith.constant 0 : index
    %91 = vector.load %arg7[%c0_66, %c0_67] : memref<16x32xf32, #tpu.memory_space<vmem>>, vector<16x32xf32>
    tpu.vector_store %arg7[%c0_66, %c0_67], %90 {strides = array<i32>} : memref<16x32xf32, #tpu.memory_space<vmem>>, vector<16x32xf32>,
    %c3 = arith.constant 3 : index
    %c0_68 = arith.constant 0 : index
    %c0_69 = arith.constant 0 : index
    %92 = vector.load %arg2[%c3, %c0_68, %c0_69] : memref<4x32x8xf32, #tpu.memory_space<vmem>>, vector<1x32x8xf32>
    %93 = vector.shape_cast %92 : vector<1x32x8xf32> to vector<32x8xf32>
    %cst_70 = arith.constant dense<0.000000e+00> : vector<16x8xf32>
    %94 = tpu.matmul %0, %93, %cst_70 {dimension_numbers = #tpu.dot_dimension_numbers<[1], [0], [0], [1], [0, 0, 1, 1], [], []>} : vector<16x32xf32>, vector<32x8xf32>, vector<16x8xf32> -> vector<16x8xf32>
    %c3_71 = arith.constant 3 : index
    %c0_72 = arith.constant 0 : index
    %c0_73 = arith.constant 0 : index
    %95 = vector.load %arg3[%c3_71, %c0_72, %c0_73] : memref<4x32x8xf32, #tpu.memory_space<vmem>>, vector<1x32x8xf32>
    %96 = vector.shape_cast %95 : vector<1x32x8xf32> to vector<32x8xf32>
    %cst_74 = arith.constant dense<0.000000e+00> : vector<16x8xf32>
    %97 = tpu.matmul %0, %96, %cst_74 {dimension_numbers = #tpu.dot_dimension_numbers<[1], [0], [0], [1], [0, 0, 1, 1], [], []>} : vector<16x32xf32>, vector<32x8xf32>, vector<16x8xf32> -> vector<16x8xf32>
    %c3_75 = arith.constant 3 : index
    %c0_76 = arith.constant 0 : index
    %c0_77 = arith.constant 0 : index
    %98 = vector.load %arg4[%c3_75, %c0_76, %c0_77] : memref<4x32x8xf32, #tpu.memory_space<vmem>>, vector<1x32x8xf32>
    %99 = vector.shape_cast %98 : vector<1x32x8xf32> to vector<32x8xf32>
    %cst_78 = arith.constant dense<0.000000e+00> : vector<16x8xf32>
    %100 = tpu.matmul %0, %99, %cst_78 {dimension_numbers = #tpu.dot_dimension_numbers<[1], [0], [0], [1], [0, 0, 1, 1], [], []>} : vector<16x32xf32>, vector<32x8xf32>, vector<16x8xf32> -> vector<16x8xf32>
    %101 = vector.shape_cast %94 : vector<16x8xf32> to vector<2x8x8xf32>
    %102 = vector.shape_cast %97 : vector<16x8xf32> to vector<2x8x8xf32>
    %103 = vector.shape_cast %100 : vector<16x8xf32> to vector<2x8x8xf32>
    "tpu.trace_start"() <{level = 10 : i32, message = "bnd,bmd->bnm"}> : () -> ()
    %cst_79 = arith.constant dense<0.000000e+00> : vector<2x8x8xf32>
    %104 = tpu.matmul %101, %102, %cst_79 {dimension_numbers = #tpu.dot_dimension_numbers<[2], [2], [1], [1], [0, 0, 0, 1, 1, 1], [0], [0]>} : vector<2x8x8xf32>, vector<2x8x8xf32>, vector<2x8x8xf32> -> vector<2x8x8xf32>
    "tpu.trace_stop"() : () -> ()
    %cst_80 = arith.constant dense<0xFF800000> : vector<2x8xf32>
    %105 = vector.multi_reduction <maximumf>, %104, %cst_80 [2] : vector<2x8x8xf32> to vector<2x8xf32>
    %106 = vector.shape_cast %105 : vector<2x8xf32> to vector<2x8x1xf32>
    %107 = vector.broadcast %106 : vector<2x8x1xf32> to vector<2x8x8xf32>
    %108 = arith.subf %104, %107 : vector<2x8x8xf32>
    %109 = math.exp %108 : vector<2x8x8xf32>
    %cst_81 = arith.constant dense<0.000000e+00> : vector<2x8xf32>
    %110 = vector.multi_reduction <add>, %109, %cst_81 [2] : vector<2x8x8xf32> to vector<2x8xf32>
    %111 = vector.shape_cast %110 : vector<2x8xf32> to vector<2x8x1xf32>
    %112 = tpu.reciprocal %111 {approx = true} : vector<2x8x1xf32> -> vector<2x8x1xf32>
    %113 = vector.broadcast %112 : vector<2x8x1xf32> to vector<2x8x8xf32>
    %114 = arith.mulf %109, %113 : vector<2x8x8xf32>
    "tpu.trace_start"() <{level = 10 : i32, message = "bnm,bmd->bnd"}> : () -> ()
    %cst_82 = arith.constant dense<0.000000e+00> : vector<2x8x8xf32>
    %115 = tpu.matmul %114, %103, %cst_82 {dimension_numbers = #tpu.dot_dimension_numbers<[2], [1], [1], [2], [0, 0, 0, 1, 1, 2], [0], [0]>} : vector<2x8x8xf32>, vector<2x8x8xf32>, vector<2x8x8xf32> -> vector<2x8x8xf32>
    "tpu.trace_stop"() : () -> ()
    %116 = vector.shape_cast %115 : vector<2x8x8xf32> to vector<16x8xf32>
    %c3_83 = arith.constant 3 : index
    %c0_84 = arith.constant 0 : index
    %c0_85 = arith.constant 0 : index
    %117 = vector.load %arg5[%c3_83, %c0_84, %c0_85] : memref<4x8x32xf32, #tpu.memory_space<vmem>>, vector<1x8x32xf32>
    %118 = vector.shape_cast %117 : vector<1x8x32xf32> to vector<8x32xf32>
    %cst_86 = arith.constant dense<0.000000e+00> : vector<16x32xf32>
    %119 = tpu.matmul %116, %118, %cst_86 {dimension_numbers = #tpu.dot_dimension_numbers<[1], [0], [0], [1], [0, 0, 1, 1], [], []>} : vector<16x8xf32>, vector<8x32xf32>, vector<16x32xf32> -> vector<16x32xf32>
    %c0_87 = arith.constant 0 : index
    %c0_88 = arith.constant 0 : index
    %120 = vector.load %arg7[%c0_87, %c0_88] : memref<16x32xf32, #tpu.memory_space<vmem>>, vector<16x32xf32>
    %121 = arith.addf %120, %119 : vector<16x32xf32>
    %c0_89 = arith.constant 0 : index
    %c0_90 = arith.constant 0 : index
    %122 = vector.load %arg7[%c0_89, %c0_90] : memref<16x32xf32, #tpu.memory_space<vmem>>, vector<16x32xf32>
    tpu.vector_store %arg7[%c0_89, %c0_90], %121 {strides = array<i32>} : memref<16x32xf32, #tpu.memory_space<vmem>>, vector<16x32xf32>,
    %c0_91 = arith.constant 0 : index
    %c0_92 = arith.constant 0 : index
    %123 = vector.load %arg7[%c0_91, %c0_92] : memref<16x32xf32, #tpu.memory_space<vmem>>, vector<16x32xf32>
    %c0_93 = arith.constant 0 : index
    %c0_94 = arith.constant 0 : index
    %124 = vector.load %arg6[%c0_93, %c0_94] : memref<16x32xf32, #tpu.memory_space<vmem>>, vector<16x32xf32>
    tpu.vector_store %arg6[%c0_93, %c0_94], %123 {strides = array<i32>} : memref<16x32xf32, #tpu.memory_space<vmem>>, vector<16x32xf32>,
    return
  }
  func.func @transform_0(%arg0: i32) -> (i32, i32) {
    %c0_i32 = arith.constant 0 : i32
    %c0_i32_0 = arith.constant 0 : i32
    return %arg0, %c0_i32 : i32, i32
  }
  func.func @transform_1(%arg0: i32) -> (i32, i32, i32) {
    %c0_i32 = arith.constant 0 : i32
    %c0_i32_0 = arith.constant 0 : i32
    %c0_i32_1 = arith.constant 0 : i32
    %c0_i32_2 = arith.constant 0 : i32
    return %c0_i32, %c0_i32_0, %c0_i32_1 : i32, i32, i32
  }
  func.func @transform_2(%arg0: i32) -> (i32, i32, i32) {
    %c0_i32 = arith.constant 0 : i32
    %c0_i32_0 = arith.constant 0 : i32
    %c0_i32_1 = arith.constant 0 : i32
    %c0_i32_2 = arith.constant 0 : i32
    return %c0_i32, %c0_i32_0, %c0_i32_1 : i32, i32, i32
  }
  func.func @transform_3(%arg0: i32) -> (i32, i32, i32) {
    %c0_i32 = arith.constant 0 : i32
    %c0_i32_0 = arith.constant 0 : i32
    %c0_i32_1 = arith.constant 0 : i32
    %c0_i32_2 = arith.constant 0 : i32
    return %c0_i32, %c0_i32_0, %c0_i32_1 : i32, i32, i32
  }
  func.func @transform_4(%arg0: i32) -> (i32, i32, i32) {
    %c0_i32 = arith.constant 0 : i32
    %c0_i32_0 = arith.constant 0 : i32
    %c0_i32_1 = arith.constant 0 : i32
    %c0_i32_2 = arith.constant 0 : i32
    return %c0_i32, %c0_i32_0, %c0_i32_1 : i32, i32, i32
  }
  func.func @transform_5(%arg0: i32) -> (i32, i32) {
    %c0_i32 = arith.constant 0 : i32
    %c0_i32_0 = arith.constant 0 : i32
    return %arg0, %c0_i32 : i32, i32
  }
}

</mosaic_0001>

<llo_original>
// kernel: tpu_custom_call.1
$region0: #{tpu_custom_call.1}
  #allocation0 [shape = 'u32[]', space=smem, size = 0x4, offset = 0x4, fixed_abs, tag = 'smem constant byte address 0x4 - core index']
  #allocation1 [shape = 'u32[72,128]{1,0:T(1,128)}', space=vmem, size = 0x9000, scoped, tag = 'internal scratch']
  #allocation2 [shape = 'f32[16,32]{1,0:T(8,128)}', space=vmem, size = 0x2000, scoped, tag = 'scratch operand']
  %s0 = inlined_call_operand.vmem [shape: f32[32,32], index: 0, kind: input, shape index: {}]
  %s1 = inlined_call_operand.vmem [shape: f32[4,32,8], index: 1, kind: input, shape index: {}]
  %s2 = inlined_call_operand.vmem [shape: f32[4,32,8], index: 2, kind: input, shape index: {}]
  %s3 = inlined_call_operand.vmem [shape: f32[4,32,8], index: 3, kind: input, shape index: {}]
  %s4 = inlined_call_operand.vmem [shape: f32[4,8,32], index: 4, kind: input, shape index: {}]
  %s5 = inlined_call_operand.hbm [shape: f32[32,32], index: 5, kind: output, shape index: {}]
  %s6 = sld [smem:[#allocation0]]
  $region53: #{tpu_custom_call.1} parent=0
    _
  %s8 = ssub.s32 1, %s6
  %s9 = scalar_select 0, %s8, %s6
  $region1: #{tpu_custom_call.1} parent=0
    #allocation3 [shape = 'u8[16384]{0}', space=vmem, size = 0x4000, scoped, tag = 'output window, operand 0']
    #allocation4 [shape = 's32[2]{0}', space=sflag, size = 0x8, scoped, tag = 'scoped memory for tpu_custom_call.1']
    %10 = vsyncpa [#allocation4], 0
    %s11 = scalar_lea.sflag [#allocation4], 1
    %12 = vsyncpa %s11, 0
    loop: start=0, step=1, limit=4
    $region2: #{tpu_custom_call.1} parent=1 // loop_pre_header
      _
    $region3: #{tpu_custom_call.1} parent=1 // loop_header
      %s14 = sphi 0, %s18
      %p15 = scmp.ge.s32.totalorder %s14, 4
      %s24 = sphi 0, %s26
      %s27 = sphi 0, %s24
      %s28 = sphi 0, %s27
      %s44 = sphi 0, %s28
      %s48 = sphi 0, %s48
      %s50 = sphi 0, %s48
      %s51 = sphi 0, %s50
      %s65 = sphi 0, %s51
      %s69 = sphi 0, %s69
      %s71 = sphi 0, %s69
      %s72 = sphi 0, %s71
      %s86 = sphi 0, %s72
      %s90 = sphi 0, %s90
      %s92 = sphi 0, %s90
      %s93 = sphi 0, %s92
      %s107 = sphi 0, %s93
      %s111 = sphi 0, %s111
      %s113 = sphi 0, %s111
      %s114 = sphi 0, %s113
      %s128 = sphi 0, %s114
      %s134 = sphi 0, %s136
      %s137 = sphi 0, %s134
      %s138 = sphi 0, %s137
      %s154 = sphi 0, %s138
    $region4: #{tpu_custom_call.1} parent=1 // loop_header_branch
      %17 = sbr.rel (%p15) target = $region8
    $region5: #{tpu_custom_call.1} parent=1 // loop_body
      %s19 = ssub.s32 %s14, 1
      %s20 = ssub.s32 %s14, 2
      %s21 = sadd.s32 %s14, 1
      %s22 = ssub.s32 %s14, %s21
      %p23 = scmp.eq.s32.totalorder %s22, 0
      %s25 = sadd.s32 %s24, 1
      %s26 = scalar_select %p23, %s24, %s25
      %p29 = pneg %p23
      %p30 = scmp.eq.s32.totalorder %s14, 1
      %p31 = por %p29, %p30
      %p32 = scmp.ne.s32.totalorder %s24, %s27
      %p33 = scmp.eq.s32.totalorder %s14, 0
      %p34 = por %p32, %p33
      %p35 = scmp.ne.s32.totalorder %s24, %s27
      %p36 = scmp.eq.s32.totalorder %s19, 1
      %p37 = por %p35, %p36
      %p38 = scmp.ne.s32.totalorder %s27, %s28
      %p39 = scmp.eq.s32.totalorder %s19, 0
      %p40 = por %p38, %p39
      %p41 = scmp.ne.s32.totalorder %s27, %s28
      %p42 = scmp.eq.s32.totalorder %s20, 1
      %p43 = por %p41, %p42
      %p45 = scmp.ne.s32.totalorder %s28, %s44
      %p46 = scmp.eq.s32.totalorder %s20, 0
      %p47 = por %p45, %p46
      %s49 = sadd.s32 %s48, 1
      %p52 = scmp.eq.s32.totalorder %s14, 1
      %p53 = scmp.ne.s32.totalorder %s48, %s50
      %p54 = scmp.eq.s32.totalorder %s14, 0
      %p55 = por %p53, %p54
      %p56 = scmp.ne.s32.totalorder %s48, %s50
      %p57 = scmp.eq.s32.totalorder %s19, 1
      %p58 = por %p56, %p57
      %p59 = scmp.ne.s32.totalorder %s50, %s51
      %p60 = scmp.eq.s32.totalorder %s19, 0
      %p61 = por %p59, %p60
      %p62 = scmp.ne.s32.totalorder %s50, %s51
      %p63 = scmp.eq.s32.totalorder %s20, 1
      %p64 = por %p62, %p63
      %p66 = scmp.ne.s32.totalorder %s51, %s65
      %p67 = scmp.eq.s32.totalorder %s20, 0
      %p68 = por %p66, %p67
      %s70 = sadd.s32 %s69, 1
      %p73 = scmp.eq.s32.totalorder %s14, 1
      %p74 = scmp.ne.s32.totalorder %s69, %s71
      %p75 = scmp.eq.s32.totalorder %s14, 0
      %p76 = por %p74, %p75
      %p77 = scmp.ne.s32.totalorder %s69, %s71
      %p78 = scmp.eq.s32.totalorder %s19, 1
      %p79 = por %p77, %p78
      %p80 = scmp.ne.s32.totalorder %s71, %s72
      %p81 = scmp.eq.s32.totalorder %s19, 0
      %p82 = por %p80, %p81
      %p83 = scmp.ne.s32.totalorder %s71, %s72
      %p84 = scmp.eq.s32.totalorder %s20, 1
      %p85 = por %p83, %p84
      %p87 = scmp.ne.s32.totalorder %s72, %s86
      %p88 = scmp.eq.s32.totalorder %s20, 0
      %p89 = por %p87, %p88
      %s91 = sadd.s32 %s90, 1
      %p94 = scmp.eq.s32.totalorder %s14, 1
      %p95 = scmp.ne.s32.totalorder %s90, %s92
      %p96 = scmp.eq.s32.totalorder %s14, 0
      %p97 = por %p95, %p96
      %p98 = scmp.ne.s32.totalorder %s90, %s92
      %p99 = scmp.eq.s32.totalorder %s19, 1
      %p100 = por %p98, %p99
      %p101 = scmp.ne.s32.totalorder %s92, %s93
      %p102 = scmp.eq.s32.totalorder %s19, 0
      %p103 = por %p101, %p102
      %p104 = scmp.ne.s32.totalorder %s92, %s93
      %p105 = scmp.eq.s32.totalorder %s20, 1
      %p106 = por %p104, %p105
      %p108 = scmp.ne.s32.totalorder %s93, %s107
      %p109 = scmp.eq.s32.totalorder %s20, 0
      %p110 = por %p108, %p109
      %s112 = sadd.s32 %s111, 1
      %p115 = scmp.eq.s32.totalorder %s14, 1
      %p116 = scmp.ne.s32.totalorder %s111, %s113
      %p117 = scmp.eq.s32.totalorder %s14, 0
      %p118 = por %p116, %p117
      %p119 = scmp.ne.s32.totalorder %s111, %s113
      %p120 = scmp.eq.s32.totalorder %s19, 1
      %p121 = por %p119, %p120
      %p122 = scmp.ne.s32.totalorder %s113, %s114
      %p123 = scmp.eq.s32.totalorder %s19, 0
      %p124 = por %p122, %p123
      %p125 = scmp.ne.s32.totalorder %s113, %s114
      %p126 = scmp.eq.s32.totalorder %s20, 1
      %p127 = por %p125, %p126
      %p129 = scmp.ne.s32.totalorder %s114, %s128
      %p130 = scmp.eq.s32.totalorder %s20, 0
      %p131 = por %p129, %p130
      %s132 = ssub.s32 %s14, %s21
      %p133 = scmp.eq.s32.totalorder %s132, 0
      %s135 = sadd.s32 %s134, 1
      %s136 = scalar_select %p133, %s134, %s135
      %p139 = pneg %p133
      %p140 = scmp.eq.s32.totalorder %s14, 1
      %p141 = por %p139, %p140
      %p142 = scmp.ne.s32.totalorder %s134, %s137
      %p143 = scmp.eq.s32.totalorder %s14, 0
      %p144 = por %p142, %p143
      %p145 = scmp.ne.s32.totalorder %s134, %s137
      %p146 = scmp.eq.s32.totalorder %s19, 1
      %p147 = por %p145, %p146
      %p148 = scmp.ne.s32.totalorder %s137, %s138
      %p149 = scmp.eq.s32.totalorder %s19, 0
      %p150 = por %p148, %p149
      %p151 = scmp.ne.s32.totalorder %s137, %s138
      %p152 = scmp.eq.s32.totalorder %s20, 1
      %p153 = por %p151, %p152
      %p155 = scmp.ne.s32.totalorder %s138, %s154
      %p156 = scmp.eq.s32.totalorder %s20, 0
      %p157 = por %p155, %p156
      %p158 = scmp.le.s32.totalorder 1, %s14
      %p159 = scmp.lt.s32.totalorder %s14, 3
      %p160 = pnand %p158, %p159
      %p161 = pneg %p160
      // Predicated region
      $region9: #{tpu_custom_call.1} parent=5 // pred_check
        _
      $region10: #{tpu_custom_call.1} parent=5 // pred_check_branch
        %163 = sbr.rel (%p160) target = $region12
      $region11: #{tpu_custom_call.1} parent=5 // pred_region
        %s164 = ssub.s32 %s14, 1
        // Predicated region
        $region13: #{tpu_custom_call.1} parent=11 // pred_check
          %p165 = pneg %p61
        $region14: #{tpu_custom_call.1} parent=11 // pred_check_branch
          %167 = sbr.rel (%p165) target = $region16
        $region15: #{tpu_custom_call.1} parent=11 // pred_region
          _
        $region16: #{tpu_custom_call.1} parent=11 // pred_fallthru
          _
        // Predicated region
        $region17: #{tpu_custom_call.1} parent=11 // pred_check
          %p168 = pneg %p82
        $region18: #{tpu_custom_call.1} parent=11 // pred_check_branch
          %170 = sbr.rel (%p168) target = $region20
        $region19: #{tpu_custom_call.1} parent=11 // pred_region
          _
        $region20: #{tpu_custom_call.1} parent=11 // pred_fallthru
          _
        // Predicated region
        $region21: #{tpu_custom_call.1} parent=11 // pred_check
          %p171 = pneg %p103
        $region22: #{tpu_custom_call.1} parent=11 // pred_check_branch
          %173 = sbr.rel (%p171) target = $region24
        $region23: #{tpu_custom_call.1} parent=11 // pred_region
          _
        $region24: #{tpu_custom_call.1} parent=11 // pred_fallthru
          _
        // Predicated region
        $region25: #{tpu_custom_call.1} parent=11 // pred_check
          %p174 = pneg %p124
        $region26: #{tpu_custom_call.1} parent=11 // pred_check_branch
          %176 = sbr.rel (%p174) target = $region28
        $region27: #{tpu_custom_call.1} parent=11 // pred_region
          _
        $region28: #{tpu_custom_call.1} parent=11 // pred_fallthru
          _
      $region12: #{tpu_custom_call.1} parent=5 // pred_fallthru
        _
      %p177 = scmp.lt.s32.totalorder %s14, 2
      // Predicated region
      $region29: #{tpu_custom_call.1} parent=5 // pred_check
        %p178 = pneg %p177
      $region30: #{tpu_custom_call.1} parent=5 // pred_check_branch
        %180 = sbr.rel (%p178) target = $region32
      $region31: #{tpu_custom_call.1} parent=5 // pred_region
        // Predicated region
        $region33: #{tpu_custom_call.1} parent=31 // pred_check
          %p181 = pneg %p34
        $region34: #{tpu_custom_call.1} parent=31 // pred_check_branch
          %183 = sbr.rel (%p181) target = $region36
        $region35: #{tpu_custom_call.1} parent=31 // pred_region
          %s184 = smul.u32 2, %s14
          %p185 = scmp.lt.s32.totalorder %s184, 3
          %s186 = scalar_select %p185, %s184, 3
          %s187 = smul.addr %s186, 8
          %s188 = scalar_lea.vmem %s0, %s187
          %s189 = smul.u32 2, %s14
        $region36: #{tpu_custom_call.1} parent=31 // pred_fallthru
          _
      $region32: #{tpu_custom_call.1} parent=5 // pred_fallthru
        _
      %p190 = scmp.le.s32.totalorder 1, %s14
      %p191 = scmp.lt.s32.totalorder %s14, 3
      %p192 = pnand %p190, %p191
      %p193 = pneg %p192
      // Predicated region
      $region37: #{tpu_custom_call.1} parent=5 // pred_check
        _
      $region38: #{tpu_custom_call.1} parent=5 // pred_check_branch
        %195 = sbr.rel (%p192) target = $region40
      $region39: #{tpu_custom_call.1} parent=5 // pred_region
        %s196 = ssub.s32 %s14, 1
        %s197 = smul.u32 2, %s19
        %p198 = scmp.lt.s32.totalorder %s197, 3
        %s199 = scalar_select %p198, %s197, 3
        %s200 = smul.addr %s199, 8
        %s201 = scalar_lea.vmem %s0, %s200
        %p202 = pneg %p40
        %p203 = pneg %p37
        %p204 = pneg %p61
        %p205 = pneg %p58
        %p206 = pneg %p82
        %p207 = pneg %p79
        %p208 = pneg %p103
        %p209 = pneg %p100
        %p210 = pneg %p124
        %p211 = pneg %p121
        %p212 = pneg %p150
        %p213 = pneg %p147
        %s214 = sand.u32 %s137, 1
        %s215 = scalar_lea.sflag [#allocation4], %s214
        %s216 = sand.u32 %s137, 1
        %s217 = smul.addr %s216, 16
        %s218 = scalar_lea.vmem [#allocation3], %s217
        %s219 = smul.u32 2, %s19
        %p220 = scmp.lt.s32.totalorder %s219, 3
        %s221 = scalar_select %p220, %s219, 3
        %s222 = smul.addr %s221, 8
        %s223 = scalar_lea.vmem %s0, %s222
        %s224 = smul.u32 2, %s19
        %s225 = smul.u32 2, %s19
        %v226 = vld [vmem:[%s223] sm:$0xff]
        %v227 = vld [vmem:[%s223 + $0x8] sm:$0xff]
        %v228 = vld [vmem:[%s1] sm:$0xff]
        %v229 = vld [vmem:[%s1 + $0x8] sm:$0xff]
        %v230 = vld [vmem:[%s1 + $0x10] sm:$0xff]
        %v231 = vld [vmem:[%s1 + $0x18] sm:$0xff]
        %vm232 = vcmask 261120
        %v234 = vsel %vm232, %v226, 0
        %v237 = vsel %vm232, %v227, 0
        %239 = vmatpush.msra.mxu0 0.0
        %240 = vmatpush.msra.mxu0 0.0
        %241 = vmatpush.msra.mxu0 0.0
        %242 = vmatpush.msra.mxu0 0.0
        %243 = vmatpush.msra.mxu0 0.0
        %244 = vmatpush.msra.mxu0 0.0
        %245 = vmatpush.msra.mxu0 0.0
        %246 = vmatpush.msra.mxu0 0.0
        %247 = vmatpush.msra.mxu0 0.0
        %248 = vmatpush.msra.mxu0 0.0
        %249 = vmatpush.msra.mxu0 0.0
        %250 = vmatpush.msra.mxu0 0.0
        %251 = vmatpush.msra.mxu0 %v231
        %252 = vmatpush.msra.mxu0 %v230
        %253 = vmatpush.msra.mxu0 %v229
        %254 = vmatpush.msra.mxu0 %v228
        %255 = vmatmul.f32.gmra.mxu0 %v234
        %v256 = vpop.f32.mrf.mxu0
        %v257 = vadd.f32 0.0, %v256
        %258 = vmatmul.f32.gmra.mxu0 %v237
        %v259 = vpop.f32.mrf.mxu0
        %v260 = vadd.f32 0.0, %v259
        %261 = vdwg.mxu0
        %v262 = vld [vmem:[%s2] sm:$0xff]
        %v263 = vld [vmem:[%s2 + $0x8] sm:$0xff]
        %v264 = vld [vmem:[%s2 + $0x10] sm:$0xff]
        %v265 = vld [vmem:[%s2 + $0x18] sm:$0xff]
        %266 = vmatpush.msra.mxu0 0.0
        %267 = vmatpush.msra.mxu0 0.0
        %268 = vmatpush.msra.mxu0 0.0
        %269 = vmatpush.msra.mxu0 0.0
        %270 = vmatpush.msra.mxu0 0.0
        %271 = vmatpush.msra.mxu0 0.0
        %272 = vmatpush.msra.mxu0 0.0
        %273 = vmatpush.msra.mxu0 0.0
        %274 = vmatpush.msra.mxu0 0.0
        %275 = vmatpush.msra.mxu0 0.0
        %276 = vmatpush.msra.mxu0 0.0
        %277 = vmatpush.msra.mxu0 0.0
        %278 = vmatpush.msra.mxu0 %v265
        %279 = vmatpush.msra.mxu0 %v264
        %280 = vmatpush.msra.mxu0 %v263
        %281 = vmatpush.msra.mxu0 %v262
        %282 = vmatmul.f32.gmra.mxu0 %v234
        %v283 = vpop.f32.mrf.mxu0
        %v284 = vadd.f32 0.0, %v283
        %285 = vmatmul.f32.gmra.mxu0 %v237
        %v286 = vpop.f32.mrf.mxu0
        %v287 = vadd.f32 0.0, %v286
        %288 = vdwg.mxu0
        %v289 = vld [vmem:[%s3] sm:$0xff]
        %v290 = vld [vmem:[%s3 + $0x8] sm:$0xff]
        %v291 = vld [vmem:[%s3 + $0x10] sm:$0xff]
        %v292 = vld [vmem:[%s3 + $0x18] sm:$0xff]
        %293 = vmatpush.msra.mxu0 0.0
        %294 = vmatpush.msra.mxu0 0.0
        %295 = vmatpush.msra.mxu0 0.0
        %296 = vmatpush.msra.mxu0 0.0
        %297 = vmatpush.msra.mxu0 0.0
        %298 = vmatpush.msra.mxu0 0.0
        %299 = vmatpush.msra.mxu0 0.0
        %300 = vmatpush.msra.mxu0 0.0
        %301 = vmatpush.msra.mxu0 0.0
        %302 = vmatpush.msra.mxu0 0.0
        %303 = vmatpush.msra.mxu0 0.0
        %304 = vmatpush.msra.mxu0 0.0
        %305 = vmatpush.msra.mxu0 %v292
        %306 = vmatpush.msra.mxu0 %v291
        %307 = vmatpush.msra.mxu0 %v290
        %308 = vmatpush.msra.mxu0 %v289
        %309 = vmatmul.f32.gmra.mxu0 %v234
        %v310 = vpop.f32.mrf.mxu0
        %v311 = vadd.f32 0.0, %v310
        %312 = vmatmul.f32.gmra.mxu0 %v237
        %v313 = vpop.f32.mrf.mxu0
        %v314 = vadd.f32 0.0, %v313
        %315 = vdwg.mxu0
        %vm316 = vcmask 64512
        %v318 = vsel %vm316, %v257, 0
        %v321 = vsel %vm316, %v284, 0
        %323 = vmatpush.xpose.msra.mxu0 0.0
        %324 = vmatpush.xpose.msra.mxu0 0.0
        %325 = vmatpush.xpose.msra.mxu0 0.0
        %326 = vmatpush.xpose.msra.mxu0 0.0
        %327 = vmatpush.xpose.msra.mxu0 0.0
        %328 = vmatpush.xpose.msra.mxu0 0.0
        %329 = vmatpush.xpose.msra.mxu0 0.0
        %330 = vmatpush.xpose.msra.mxu0 0.0
        %331 = vmatpush.xpose.msra.mxu0 0.0
        %332 = vmatpush.xpose.msra.mxu0 0.0
        %333 = vmatpush.xpose.msra.mxu0 0.0
        %334 = vmatpush.xpose.msra.mxu0 0.0
        %335 = vmatpush.xpose.msra.mxu0 0.0
        %336 = vmatpush.xpose.msra.mxu0 0.0
        %337 = vmatpush.xpose.msra.mxu0 0.0
        %338 = vmatpush.xpose.msra.mxu0 %v321
        %339 = vmatmul.f32.gmra.mxu0 %v318
        %v340 = vpop.f32.mrf.mxu0
        %v341 = vadd.f32 0.0, %v340
        %342 = vdwg.mxu0
        %v344 = vsel %vm316, %v260, 0
        %v347 = vsel %vm316, %v287, 0
        %349 = vmatpush.xpose.msra.mxu0 0.0
        %350 = vmatpush.xpose.msra.mxu0 0.0
        %351 = vmatpush.xpose.msra.mxu0 0.0
        %352 = vmatpush.xpose.msra.mxu0 0.0
        %353 = vmatpush.xpose.msra.mxu0 0.0
        %354 = vmatpush.xpose.msra.mxu0 0.0
        %355 = vmatpush.xpose.msra.mxu0 0.0
        %356 = vmatpush.xpose.msra.mxu0 0.0
        %357 = vmatpush.xpose.msra.mxu0 0.0
        %358 = vmatpush.xpose.msra.mxu0 0.0
        %359 = vmatpush.xpose.msra.mxu0 0.0
        %360 = vmatpush.xpose.msra.mxu0 0.0
        %361 = vmatpush.xpose.msra.mxu0 0.0
        %362 = vmatpush.xpose.msra.mxu0 0.0
        %363 = vmatpush.xpose.msra.mxu0 0.0
        %364 = vmatpush.xpose.msra.mxu0 %v347
        %365 = vmatmul.f32.gmra.mxu0 %v344
        %v366 = vpop.f32.mrf.mxu0
        %v367 = vadd.f32 0.0, %v366
        %368 = vdwg.mxu0
        %v369 = vsel %vm316, %v341, -inf
        %370 = vmax.xlane.f32.xlu0 %v369
        %v371 = vpop.xlane.xlu0 %370
        %v372 = vsel %vm316, %v367, -inf
        %373 = vmax.xlane.f32.xlu0 %v372
        %v374 = vpop.xlane.xlu0 %373
        %v375 = vsub.f32 %v341, %v371
        %v376 = vsub.f32 %v367, %v374
        %v377 = vmul.f32 %v375, 1.442695
        %v378 = vpow.pop %v377
        %v379 = vmul.f32 %v376, 1.442695
        %v380 = vpow.pop %v379
        %v381 = vsel %vm316, %v378, 0.0
        %382 = vadd.xlane.f32.xlu0 %v381
        %v383 = vpop.xlane.xlu0 %382
        %v384 = vsel %vm316, %v380, 0.0
        %385 = vadd.xlane.f32.xlu0 %v384
        %v386 = vpop.xlane.xlu0 %385
        %v387 = vrcp.pop %v383
        %v388 = vrcp.pop %v386
        %v389 = vmul.f32 %v378, %v387
        %v390 = vmul.f32 %v380, %v388
        %v392 = vsel %vm316, %v389, 0
        %394 = vmatpush.msra.mxu0 0.0
        %395 = vmatpush.msra.mxu0 0.0
        %396 = vmatpush.msra.mxu0 0.0
        %397 = vmatpush.msra.mxu0 0.0
        %398 = vmatpush.msra.mxu0 0.0
        %399 = vmatpush.msra.mxu0 0.0
        %400 = vmatpush.msra.mxu0 0.0
        %401 = vmatpush.msra.mxu0 0.0
        %402 = vmatpush.msra.mxu0 0.0
        %403 = vmatpush.msra.mxu0 0.0
        %404 = vmatpush.msra.mxu0 0.0
        %405 = vmatpush.msra.mxu0 0.0
        %406 = vmatpush.msra.mxu0 0.0
        %407 = vmatpush.msra.mxu0 0.0
        %408 = vmatpush.msra.mxu0 0.0
        %409 = vmatpush.msra.mxu0 %v311
        %410 = vmatmul.f32.gmra.mxu0 %v392
        %v411 = vpop.f32.mrf.mxu0
        %v412 = vadd.f32 0.0, %v411
        %413 = vdwg.mxu0
        %v415 = vsel %vm316, %v390, 0
        %417 = vmatpush.msra.mxu0 0.0
        %418 = vmatpush.msra.mxu0 0.0
        %419 = vmatpush.msra.mxu0 0.0
        %420 = vmatpush.msra.mxu0 0.0
        %421 = vmatpush.msra.mxu0 0.0
        %422 = vmatpush.msra.mxu0 0.0
        %423 = vmatpush.msra.mxu0 0.0
        %424 = vmatpush.msra.mxu0 0.0
        %425 = vmatpush.msra.mxu0 0.0
        %426 = vmatpush.msra.mxu0 0.0
        %427 = vmatpush.msra.mxu0 0.0
        %428 = vmatpush.msra.mxu0 0.0
        %429 = vmatpush.msra.mxu0 0.0
        %430 = vmatpush.msra.mxu0 0.0
        %431 = vmatpush.msra.mxu0 0.0
        %432 = vmatpush.msra.mxu0 %v314
        %433 = vmatmul.f32.gmra.mxu0 %v415
        %v434 = vpop.f32.mrf.mxu0
        %v435 = vadd.f32 0.0, %v434
        %436 = vdwg.mxu0
        %v437 = vld [vmem:[%s4] sm:$0xff]
        %v439 = vsel %vm316, %v412, 0
        %v442 = vsel %vm316, %v435, 0
        %444 = vmatpush.msra.mxu0 0.0
        %445 = vmatpush.msra.mxu0 0.0
        %446 = vmatpush.msra.mxu0 0.0
        %447 = vmatpush.msra.mxu0 0.0
        %448 = vmatpush.msra.mxu0 0.0
        %449 = vmatpush.msra.mxu0 0.0
        %450 = vmatpush.msra.mxu0 0.0
        %451 = vmatpush.msra.mxu0 0.0
        %452 = vmatpush.msra.mxu0 0.0
        %453 = vmatpush.msra.mxu0 0.0
        %454 = vmatpush.msra.mxu0 0.0
        %455 = vmatpush.msra.mxu0 0.0
        %456 = vmatpush.msra.mxu0 0.0
        %457 = vmatpush.msra.mxu0 0.0
        %458 = vmatpush.msra.mxu0 0.0
        %459 = vmatpush.msra.mxu0 %v437
        %460 = vmatmul.f32.gmra.mxu0 %v439
        %v461 = vpop.f32.mrf.mxu0
        %v462 = vadd.f32 0.0, %v461
        %463 = vmatmul.f32.gmra.mxu0 %v442
        %v464 = vpop.f32.mrf.mxu0
        %v465 = vadd.f32 0.0, %v464
        %466 = vdwg.mxu0
        %467 = vst.msk [vmem:[#allocation2] sm:$0xff] %vm232, %v462
        %468 = vst.msk [vmem:[#allocation2 + $0x8] sm:$0xff] %vm232, %v465
        %s469 = scalar_lea.vmem %s1, 32
        %v470 = vld [vmem:[%s469] sm:$0xff]
        %v471 = vld [vmem:[%s469 + $0x8] sm:$0xff]
        %v472 = vld [vmem:[%s469 + $0x10] sm:$0xff]
        %v473 = vld [vmem:[%s469 + $0x18] sm:$0xff]
        %474 = vmatpush.msra.mxu0 0.0
        %475 = vmatpush.msra.mxu0 0.0
        %476 = vmatpush.msra.mxu0 0.0
        %477 = vmatpush.msra.mxu0 0.0
        %478 = vmatpush.msra.mxu0 0.0
        %479 = vmatpush.msra.mxu0 0.0
        %480 = vmatpush.msra.mxu0 0.0
        %481 = vmatpush.msra.mxu0 0.0
        %482 = vmatpush.msra.mxu0 0.0
        %483 = vmatpush.msra.mxu0 0.0
        %484 = vmatpush.msra.mxu0 0.0
        %485 = vmatpush.msra.mxu0 0.0
        %486 = vmatpush.msra.mxu0 %v473
        %487 = vmatpush.msra.mxu0 %v472
        %488 = vmatpush.msra.mxu0 %v471
        %489 = vmatpush.msra.mxu0 %v470
        %490 = vmatmul.f32.gmra.mxu0 %v234
        %v491 = vpop.f32.mrf.mxu0
        %v492 = vadd.f32 0.0, %v491
        %493 = vmatmul.f32.gmra.mxu0 %v237
        %v494 = vpop.f32.mrf.mxu0
        %v495 = vadd.f32 0.0, %v494
        %496 = vdwg.mxu0
        %s497 = scalar_lea.vmem %s2, 32
        %v498 = vld [vmem:[%s497] sm:$0xff]
        %v499 = vld [vmem:[%s497 + $0x8] sm:$0xff]
        %v500 = vld [vmem:[%s497 + $0x10] sm:$0xff]
        %v501 = vld [vmem:[%s497 + $0x18] sm:$0xff]
        %502 = vmatpush.msra.mxu0 0.0
        %503 = vmatpush.msra.mxu0 0.0
        %504 = vmatpush.msra.mxu0 0.0
        %505 = vmatpush.msra.mxu0 0.0
        %506 = vmatpush.msra.mxu0 0.0
        %507 = vmatpush.msra.mxu0 0.0
        %508 = vmatpush.msra.mxu0 0.0
        %509 = vmatpush.msra.mxu0 0.0
        %510 = vmatpush.msra.mxu0 0.0
        %511 = vmatpush.msra.mxu0 0.0
        %512 = vmatpush.msra.mxu0 0.0
        %513 = vmatpush.msra.mxu0 0.0
        %514 = vmatpush.msra.mxu0 %v501
        %515 = vmatpush.msra.mxu0 %v500
        %516 = vmatpush.msra.mxu0 %v499
        %517 = vmatpush.msra.mxu0 %v498
        %518 = vmatmul.f32.gmra.mxu0 %v234
        %v519 = vpop.f32.mrf.mxu0
        %v520 = vadd.f32 0.0, %v519
        %521 = vmatmul.f32.gmra.mxu0 %v237
        %v522 = vpop.f32.mrf.mxu0
        %v523 = vadd.f32 0.0, %v522
        %524 = vdwg.mxu0
        %s525 = scalar_lea.vmem %s3, 32
        %v526 = vld [vmem:[%s525] sm:$0xff]
        %v527 = vld [vmem:[%s525 + $0x8] sm:$0xff]
        %v528 = vld [vmem:[%s525 + $0x10] sm:$0xff]
        %v529 = vld [vmem:[%s525 + $0x18] sm:$0xff]
        %530 = vmatpush.msra.mxu0 0.0
        %531 = vmatpush.msra.mxu0 0.0
        %532 = vmatpush.msra.mxu0 0.0
        %533 = vmatpush.msra.mxu0 0.0
        %534 = vmatpush.msra.mxu0 0.0
        %535 = vmatpush.msra.mxu0 0.0
        %536 = vmatpush.msra.mxu0 0.0
        %537 = vmatpush.msra.mxu0 0.0
        %538 = vmatpush.msra.mxu0 0.0
        %539 = vmatpush.msra.mxu0 0.0
        %540 = vmatpush.msra.mxu0 0.0
        %541 = vmatpush.msra.mxu0 0.0
        %542 = vmatpush.msra.mxu0 %v529
        %543 = vmatpush.msra.mxu0 %v528
        %544 = vmatpush.msra.mxu0 %v527
        %545 = vmatpush.msra.mxu0 %v526
        %546 = vmatmul.f32.gmra.mxu0 %v234
        %v547 = vpop.f32.mrf.mxu0
        %v548 = vadd.f32 0.0, %v547
        %549 = vmatmul.f32.gmra.mxu0 %v237
        %v550 = vpop.f32.mrf.mxu0
        %v551 = vadd.f32 0.0, %v550
        %552 = vdwg.mxu0
        %v554 = vsel %vm316, %v492, 0
        %v557 = vsel %vm316, %v520, 0
        %559 = vmatpush.xpose.msra.mxu0 0.0
        %560 = vmatpush.xpose.msra.mxu0 0.0
        %561 = vmatpush.xpose.msra.mxu0 0.0
        %562 = vmatpush.xpose.msra.mxu0 0.0
        %563 = vmatpush.xpose.msra.mxu0 0.0
        %564 = vmatpush.xpose.msra.mxu0 0.0
        %565 = vmatpush.xpose.msra.mxu0 0.0
        %566 = vmatpush.xpose.msra.mxu0 0.0
        %567 = vmatpush.xpose.msra.mxu0 0.0
        %568 = vmatpush.xpose.msra.mxu0 0.0
        %569 = vmatpush.xpose.msra.mxu0 0.0
        %570 = vmatpush.xpose.msra.mxu0 0.0
        %571 = vmatpush.xpose.msra.mxu0 0.0
        %572 = vmatpush.xpose.msra.mxu0 0.0
        %573 = vmatpush.xpose.msra.mxu0 0.0
        %574 = vmatpush.xpose.msra.mxu0 %v557
        %575 = vmatmul.f32.gmra.mxu0 %v554
        %v576 = vpop.f32.mrf.mxu0
        %v577 = vadd.f32 0.0, %v576
        %578 = vdwg.mxu0
        %v580 = vsel %vm316, %v495, 0
        %v583 = vsel %vm316, %v523, 0
        %585 = vmatpush.xpose.msra.mxu0 0.0
        %586 = vmatpush.xpose.msra.mxu0 0.0
        %587 = vmatpush.xpose.msra.mxu0 0.0
        %588 = vmatpush.xpose.msra.mxu0 0.0
        %589 = vmatpush.xpose.msra.mxu0 0.0
        %590 = vmatpush.xpose.msra.mxu0 0.0
        %591 = vmatpush.xpose.msra.mxu0 0.0
        %592 = vmatpush.xpose.msra.mxu0 0.0
        %593 = vmatpush.xpose.msra.mxu0 0.0
        %594 = vmatpush.xpose.msra.mxu0 0.0
        %595 = vmatpush.xpose.msra.mxu0 0.0
        %596 = vmatpush.xpose.msra.mxu0 0.0
        %597 = vmatpush.xpose.msra.mxu0 0.0
        %598 = vmatpush.xpose.msra.mxu0 0.0
        %599 = vmatpush.xpose.msra.mxu0 0.0
        %600 = vmatpush.xpose.msra.mxu0 %v583
        %601 = vmatmul.f32.gmra.mxu0 %v580
        %v602 = vpop.f32.mrf.mxu0
        %v603 = vadd.f32 0.0, %v602
        %604 = vdwg.mxu0
        %v605 = vsel %vm316, %v577, -inf
        %606 = vmax.xlane.f32.xlu0 %v605
        %v607 = vpop.xlane.xlu0 %606
        %v608 = vsel %vm316, %v603, -inf
        %609 = vmax.xlane.f32.xlu0 %v608
        %v610 = vpop.xlane.xlu0 %609
        %v611 = vsub.f32 %v577, %v607
        %v612 = vsub.f32 %v603, %v610
        %v613 = vmul.f32 %v611, 1.442695
        %v614 = vpow.pop %v613
        %v615 = vmul.f32 %v612, 1.442695
        %v616 = vpow.pop %v615
        %v617 = vsel %vm316, %v614, 0.0
        %618 = vadd.xlane.f32.xlu0 %v617
        %v619 = vpop.xlane.xlu0 %618
        %v620 = vsel %vm316, %v616, 0.0
        %621 = vadd.xlane.f32.xlu0 %v620
        %v622 = vpop.xlane.xlu0 %621
        %v623 = vrcp.pop %v619
        %v624 = vrcp.pop %v622
        %v625 = vmul.f32 %v614, %v623
        %v626 = vmul.f32 %v616, %v624
        %v628 = vsel %vm316, %v625, 0
        %630 = vmatpush.msra.mxu0 0.0
        %631 = vmatpush.msra.mxu0 0.0
        %632 = vmatpush.msra.mxu0 0.0
        %633 = vmatpush.msra.mxu0 0.0
        %634 = vmatpush.msra.mxu0 0.0
        %635 = vmatpush.msra.mxu0 0.0
        %636 = vmatpush.msra.mxu0 0.0
        %637 = vmatpush.msra.mxu0 0.0
        %638 = vmatpush.msra.mxu0 0.0
        %639 = vmatpush.msra.mxu0 0.0
        %640 = vmatpush.msra.mxu0 0.0
        %641 = vmatpush.msra.mxu0 0.0
        %642 = vmatpush.msra.mxu0 0.0
        %643 = vmatpush.msra.mxu0 0.0
        %644 = vmatpush.msra.mxu0 0.0
        %645 = vmatpush.msra.mxu0 %v548
        %646 = vmatmul.f32.gmra.mxu0 %v628
        %v647 = vpop.f32.mrf.mxu0
        %v648 = vadd.f32 0.0, %v647
        %649 = vdwg.mxu0
        %v651 = vsel %vm316, %v626, 0
        %653 = vmatpush.msra.mxu0 0.0
        %654 = vmatpush.msra.mxu0 0.0
        %655 = vmatpush.msra.mxu0 0.0
        %656 = vmatpush.msra.mxu0 0.0
        %657 = vmatpush.msra.mxu0 0.0
        %658 = vmatpush.msra.mxu0 0.0
        %659 = vmatpush.msra.mxu0 0.0
        %660 = vmatpush.msra.mxu0 0.0
        %661 = vmatpush.msra.mxu0 0.0
        %662 = vmatpush.msra.mxu0 0.0
        %663 = vmatpush.msra.mxu0 0.0
        %664 = vmatpush.msra.mxu0 0.0
        %665 = vmatpush.msra.mxu0 0.0
        %666 = vmatpush.msra.mxu0 0.0
        %667 = vmatpush.msra.mxu0 0.0
        %668 = vmatpush.msra.mxu0 %v551
        %669 = vmatmul.f32.gmra.mxu0 %v651
        %v670 = vpop.f32.mrf.mxu0
        %v671 = vadd.f32 0.0, %v670
        %672 = vdwg.mxu0
        %s673 = scalar_lea.vmem %s4, 8
        %v674 = vld [vmem:[%s673] sm:$0xff]
        %v676 = vsel %vm316, %v648, 0
        %v679 = vsel %vm316, %v671, 0
        %681 = vmatpush.msra.mxu0 0.0
        %682 = vmatpush.msra.mxu0 0.0
        %683 = vmatpush.msra.mxu0 0.0
        %684 = vmatpush.msra.mxu0 0.0
        %685 = vmatpush.msra.mxu0 0.0
        %686 = vmatpush.msra.mxu0 0.0
        %687 = vmatpush.msra.mxu0 0.0
        %688 = vmatpush.msra.mxu0 0.0
        %689 = vmatpush.msra.mxu0 0.0
        %690 = vmatpush.msra.mxu0 0.0
        %691 = vmatpush.msra.mxu0 0.0
        %692 = vmatpush.msra.mxu0 0.0
        %693 = vmatpush.msra.mxu0 0.0
        %694 = vmatpush.msra.mxu0 0.0
        %695 = vmatpush.msra.mxu0 0.0
        %696 = vmatpush.msra.mxu0 %v674
        %697 = vmatmul.f32.gmra.mxu0 %v676
        %v698 = vpop.f32.mrf.mxu0
        %v699 = vadd.f32 0.0, %v698
        %700 = vmatmul.f32.gmra.mxu0 %v679
        %v701 = vpop.f32.mrf.mxu0
        %v702 = vadd.f32 0.0, %v701
        %703 = vdwg.mxu0
        %v704 = vld [vmem:[#allocation2] sm:$0xff]
        %v705 = vld [vmem:[#allocation2 + $0x8] sm:$0xff]
        %v706 = vadd.f32 %v704, %v699
        %v707 = vadd.f32 %v705, %v702
        %708 = vst.msk [vmem:[#allocation2] sm:$0xff] %vm232, %v706
        %709 = vst.msk [vmem:[#allocation2 + $0x8] sm:$0xff] %vm232, %v707
        %s710 = scalar_lea.vmem %s1, 64
        %v711 = vld [vmem:[%s710] sm:$0xff]
        %v712 = vld [vmem:[%s710 + $0x8] sm:$0xff]
        %v713 = vld [vmem:[%s710 + $0x10] sm:$0xff]
        %v714 = vld [vmem:[%s710 + $0x18] sm:$0xff]
        %715 = vmatpush.msra.mxu0 0.0
        %716 = vmatpush.msra.mxu0 0.0
        %717 = vmatpush.msra.mxu0 0.0
        %718 = vmatpush.msra.mxu0 0.0
        %719 = vmatpush.msra.mxu0 0.0
        %720 = vmatpush.msra.mxu0 0.0
        %721 = vmatpush.msra.mxu0 0.0
        %722 = vmatpush.msra.mxu0 0.0
        %723 = vmatpush.msra.mxu0 0.0
        %724 = vmatpush.msra.mxu0 0.0
        %725 = vmatpush.msra.mxu0 0.0
        %726 = vmatpush.msra.mxu0 0.0
        %727 = vmatpush.msra.mxu0 %v714
        %728 = vmatpush.msra.mxu0 %v713
        %729 = vmatpush.msra.mxu0 %v712
        %730 = vmatpush.msra.mxu0 %v711
        %731 = vmatmul.f32.gmra.mxu0 %v234
        %v732 = vpop.f32.mrf.mxu0
        %v733 = vadd.f32 0.0, %v732
        %734 = vmatmul.f32.gmra.mxu0 %v237
        %v735 = vpop.f32.mrf.mxu0
        %v736 = vadd.f32 0.0, %v735
        %737 = vdwg.mxu0
        %s738 = scalar_lea.vmem %s2, 64
        %v739 = vld [vmem:[%s738] sm:$0xff]
        %v740 = vld [vmem:[%s738 + $0x8] sm:$0xff]
        %v741 = vld [vmem:[%s738 + $0x10] sm:$0xff]
        %v742 = vld [vmem:[%s738 + $0x18] sm:$0xff]
        %743 = vmatpush.msra.mxu0 0.0
        %744 = vmatpush.msra.mxu0 0.0
        %745 = vmatpush.msra.mxu0 0.0
        %746 = vmatpush.msra.mxu0 0.0
        %747 = vmatpush.msra.mxu0 0.0
        %748 = vmatpush.msra.mxu0 0.0
        %749 = vmatpush.msra.mxu0 0.0
        %750 = vmatpush.msra.mxu0 0.0
        %751 = vmatpush.msra.mxu0 0.0
        %752 = vmatpush.msra.mxu0 0.0
        %753 = vmatpush.msra.mxu0 0.0
        %754 = vmatpush.msra.mxu0 0.0
        %755 = vmatpush.msra.mxu0 %v742
        %756 = vmatpush.msra.mxu0 %v741
        %757 = vmatpush.msra.mxu0 %v740
        %758 = vmatpush.msra.mxu0 %v739
        %759 = vmatmul.f32.gmra.mxu0 %v234
        %v760 = vpop.f32.mrf.mxu0
        %v761 = vadd.f32 0.0, %v760
        %762 = vmatmul.f32.gmra.mxu0 %v237
        %v763 = vpop.f32.mrf.mxu0
        %v764 = vadd.f32 0.0, %v763
        %765 = vdwg.mxu0
        %s766 = scalar_lea.vmem %s3, 64
        %v767 = vld [vmem:[%s766] sm:$0xff]
        %v768 = vld [vmem:[%s766 + $0x8] sm:$0xff]
        %v769 = vld [vmem:[%s766 + $0x10] sm:$0xff]
        %v770 = vld [vmem:[%s766 + $0x18] sm:$0xff]
        %771 = vmatpush.msra.mxu0 0.0
        %772 = vmatpush.msra.mxu0 0.0
        %773 = vmatpush.msra.mxu0 0.0
        %774 = vmatpush.msra.mxu0 0.0
        %775 = vmatpush.msra.mxu0 0.0
        %776 = vmatpush.msra.mxu0 0.0
        %777 = vmatpush.msra.mxu0 0.0
        %778 = vmatpush.msra.mxu0 0.0
        %779 = vmatpush.msra.mxu0 0.0
        %780 = vmatpush.msra.mxu0 0.0
        %781 = vmatpush.msra.mxu0 0.0
        %782 = vmatpush.msra.mxu0 0.0
        %783 = vmatpush.msra.mxu0 %v770
        %784 = vmatpush.msra.mxu0 %v769
        %785 = vmatpush.msra.mxu0 %v768
        %786 = vmatpush.msra.mxu0 %v767
        %787 = vmatmul.f32.gmra.mxu0 %v234
        %v788 = vpop.f32.mrf.mxu0
        %v789 = vadd.f32 0.0, %v788
        %790 = vmatmul.f32.gmra.mxu0 %v237
        %v791 = vpop.f32.mrf.mxu0
        %v792 = vadd.f32 0.0, %v791
        %793 = vdwg.mxu0
        %v795 = vsel %vm316, %v733, 0
        %v798 = vsel %vm316, %v761, 0
        %800 = vmatpush.xpose.msra.mxu0 0.0
        %801 = vmatpush.xpose.msra.mxu0 0.0
        %802 = vmatpush.xpose.msra.mxu0 0.0
        %803 = vmatpush.xpose.msra.mxu0 0.0
        %804 = vmatpush.xpose.msra.mxu0 0.0
        %805 = vmatpush.xpose.msra.mxu0 0.0
        %806 = vmatpush.xpose.msra.mxu0 0.0
        %807 = vmatpush.xpose.msra.mxu0 0.0
        %808 = vmatpush.xpose.msra.mxu0 0.0
        %809 = vmatpush.xpose.msra.mxu0 0.0
        %810 = vmatpush.xpose.msra.mxu0 0.0
        %811 = vmatpush.xpose.msra.mxu0 0.0
        %812 = vmatpush.xpose.msra.mxu0 0.0
        %813 = vmatpush.xpose.msra.mxu0 0.0
        %814 = vmatpush.xpose.msra.mxu0 0.0
        %815 = vmatpush.xpose.msra.mxu0 %v798
        %816 = vmatmul.f32.gmra.mxu0 %v795
        %v817 = vpop.f32.mrf.mxu0
        %v818 = vadd.f32 0.0, %v817
        %819 = vdwg.mxu0
        %v821 = vsel %vm316, %v736, 0
        %v824 = vsel %vm316, %v764, 0
        %826 = vmatpush.xpose.msra.mxu0 0.0
        %827 = vmatpush.xpose.msra.mxu0 0.0
        %828 = vmatpush.xpose.msra.mxu0 0.0
        %829 = vmatpush.xpose.msra.mxu0 0.0
        %830 = vmatpush.xpose.msra.mxu0 0.0
        %831 = vmatpush.xpose.msra.mxu0 0.0
        %832 = vmatpush.xpose.msra.mxu0 0.0
        %833 = vmatpush.xpose.msra.mxu0 0.0
        %834 = vmatpush.xpose.msra.mxu0 0.0
        %835 = vmatpush.xpose.msra.mxu0 0.0
        %836 = vmatpush.xpose.msra.mxu0 0.0
        %837 = vmatpush.xpose.msra.mxu0 0.0
        %838 = vmatpush.xpose.msra.mxu0 0.0
        %839 = vmatpush.xpose.msra.mxu0 0.0
        %840 = vmatpush.xpose.msra.mxu0 0.0
        %841 = vmatpush.xpose.msra.mxu0 %v824
        %842 = vmatmul.f32.gmra.mxu0 %v821
        %v843 = vpop.f32.mrf.mxu0
        %v844 = vadd.f32 0.0, %v843
        %845 = vdwg.mxu0
        %v846 = vsel %vm316, %v818, -inf
        %847 = vmax.xlane.f32.xlu0 %v846
        %v848 = vpop.xlane.xlu0 %847
        %v849 = vsel %vm316, %v844, -inf
        %850 = vmax.xlane.f32.xlu0 %v849
        %v851 = vpop.xlane.xlu0 %850
        %v852 = vsub.f32 %v818, %v848
        %v853 = vsub.f32 %v844, %v851
        %v854 = vmul.f32 %v852, 1.442695
        %v855 = vpow.pop %v854
        %v856 = vmul.f32 %v853, 1.442695
        %v857 = vpow.pop %v856
        %v858 = vsel %vm316, %v855, 0.0
        %859 = vadd.xlane.f32.xlu0 %v858
        %v860 = vpop.xlane.xlu0 %859
        %v861 = vsel %vm316, %v857, 0.0
        %862 = vadd.xlane.f32.xlu0 %v861
        %v863 = vpop.xlane.xlu0 %862
        %v864 = vrcp.pop %v860
        %v865 = vrcp.pop %v863
        %v866 = vmul.f32 %v855, %v864
        %v867 = vmul.f32 %v857, %v865
        %v869 = vsel %vm316, %v866, 0
        %871 = vmatpush.msra.mxu0 0.0
        %872 = vmatpush.msra.mxu0 0.0
        %873 = vmatpush.msra.mxu0 0.0
        %874 = vmatpush.msra.mxu0 0.0
        %875 = vmatpush.msra.mxu0 0.0
        %876 = vmatpush.msra.mxu0 0.0
        %877 = vmatpush.msra.mxu0 0.0
        %878 = vmatpush.msra.mxu0 0.0
        %879 = vmatpush.msra.mxu0 0.0
        %880 = vmatpush.msra.mxu0 0.0
        %881 = vmatpush.msra.mxu0 0.0
        %882 = vmatpush.msra.mxu0 0.0
        %883 = vmatpush.msra.mxu0 0.0
        %884 = vmatpush.msra.mxu0 0.0
        %885 = vmatpush.msra.mxu0 0.0
        %886 = vmatpush.msra.mxu0 %v789
        %887 = vmatmul.f32.gmra.mxu0 %v869
        %v888 = vpop.f32.mrf.mxu0
        %v889 = vadd.f32 0.0, %v888
        %890 = vdwg.mxu0
        %v892 = vsel %vm316, %v867, 0
        %894 = vmatpush.msra.mxu0 0.0
        %895 = vmatpush.msra.mxu0 0.0
        %896 = vmatpush.msra.mxu0 0.0
        %897 = vmatpush.msra.mxu0 0.0
        %898 = vmatpush.msra.mxu0 0.0
        %899 = vmatpush.msra.mxu0 0.0
        %900 = vmatpush.msra.mxu0 0.0
        %901 = vmatpush.msra.mxu0 0.0
        %902 = vmatpush.msra.mxu0 0.0
        %903 = vmatpush.msra.mxu0 0.0
        %904 = vmatpush.msra.mxu0 0.0
        %905 = vmatpush.msra.mxu0 0.0
        %906 = vmatpush.msra.mxu0 0.0
        %907 = vmatpush.msra.mxu0 0.0
        %908 = vmatpush.msra.mxu0 0.0
        %909 = vmatpush.msra.mxu0 %v792
        %910 = vmatmul.f32.gmra.mxu0 %v892
        %v911 = vpop.f32.mrf.mxu0
        %v912 = vadd.f32 0.0, %v911
        %913 = vdwg.mxu0
        %s914 = scalar_lea.vmem %s4, 16
        %v915 = vld [vmem:[%s914] sm:$0xff]
        %v917 = vsel %vm316, %v889, 0
        %v920 = vsel %vm316, %v912, 0
        %922 = vmatpush.msra.mxu0 0.0
        %923 = vmatpush.msra.mxu0 0.0
        %924 = vmatpush.msra.mxu0 0.0
        %925 = vmatpush.msra.mxu0 0.0
        %926 = vmatpush.msra.mxu0 0.0
        %927 = vmatpush.msra.mxu0 0.0
        %928 = vmatpush.msra.mxu0 0.0
        %929 = vmatpush.msra.mxu0 0.0
        %930 = vmatpush.msra.mxu0 0.0
        %931 = vmatpush.msra.mxu0 0.0
        %932 = vmatpush.msra.mxu0 0.0
        %933 = vmatpush.msra.mxu0 0.0
        %934 = vmatpush.msra.mxu0 0.0
        %935 = vmatpush.msra.mxu0 0.0
        %936 = vmatpush.msra.mxu0 0.0
        %937 = vmatpush.msra.mxu0 %v915
        %938 = vmatmul.f32.gmra.mxu0 %v917
        %v939 = vpop.f32.mrf.mxu0
        %v940 = vadd.f32 0.0, %v939
        %941 = vmatmul.f32.gmra.mxu0 %v920
        %v942 = vpop.f32.mrf.mxu0
        %v943 = vadd.f32 0.0, %v942
        %944 = vdwg.mxu0
        %v945 = vld [vmem:[#allocation2] sm:$0xff]
        %v946 = vld [vmem:[#allocation2 + $0x8] sm:$0xff]
        %v947 = vadd.f32 %v945, %v940
        %v948 = vadd.f32 %v946, %v943
        %949 = vst.msk [vmem:[#allocation2] sm:$0xff] %vm232, %v947
        %950 = vst.msk [vmem:[#allocation2 + $0x8] sm:$0xff] %vm232, %v948
        %s951 = scalar_lea.vmem %s1, 96
        %v952 = vld [vmem:[%s951] sm:$0xff]
        %v953 = vld [vmem:[%s951 + $0x8] sm:$0xff]
        %v954 = vld [vmem:[%s951 + $0x10] sm:$0xff]
        %v955 = vld [vmem:[%s951 + $0x18] sm:$0xff]
        %956 = vmatpush.msra.mxu0 0.0
        %957 = vmatpush.msra.mxu0 0.0
        %958 = vmatpush.msra.mxu0 0.0
        %959 = vmatpush.msra.mxu0 0.0
        %960 = vmatpush.msra.mxu0 0.0
        %961 = vmatpush.msra.mxu0 0.0
        %962 = vmatpush.msra.mxu0 0.0
        %963 = vmatpush.msra.mxu0 0.0
        %964 = vmatpush.msra.mxu0 0.0
        %965 = vmatpush.msra.mxu0 0.0
        %966 = vmatpush.msra.mxu0 0.0
        %967 = vmatpush.msra.mxu0 0.0
        %968 = vmatpush.msra.mxu0 %v955
        %969 = vmatpush.msra.mxu0 %v954
        %970 = vmatpush.msra.mxu0 %v953
        %971 = vmatpush.msra.mxu0 %v952
        %972 = vmatmul.f32.gmra.mxu0 %v234
        %v973 = vpop.f32.mrf.mxu0
        %v974 = vadd.f32 0.0, %v973
        %975 = vmatmul.f32.gmra.mxu0 %v237
        %v976 = vpop.f32.mrf.mxu0
        %v977 = vadd.f32 0.0, %v976
        %978 = vdwg.mxu0
        %s979 = scalar_lea.vmem %s2, 96
        %v980 = vld [vmem:[%s979] sm:$0xff]
        %v981 = vld [vmem:[%s979 + $0x8] sm:$0xff]
        %v982 = vld [vmem:[%s979 + $0x10] sm:$0xff]
        %v983 = vld [vmem:[%s979 + $0x18] sm:$0xff]
        %984 = vmatpush.msra.mxu0 0.0
        %985 = vmatpush.msra.mxu0 0.0
        %986 = vmatpush.msra.mxu0 0.0
        %987 = vmatpush.msra.mxu0 0.0
        %988 = vmatpush.msra.mxu0 0.0
        %989 = vmatpush.msra.mxu0 0.0
        %990 = vmatpush.msra.mxu0 0.0
        %991 = vmatpush.msra.mxu0 0.0
        %992 = vmatpush.msra.mxu0 0.0
        %993 = vmatpush.msra.mxu0 0.0
        %994 = vmatpush.msra.mxu0 0.0
        %995 = vmatpush.msra.mxu0 0.0
        %996 = vmatpush.msra.mxu0 %v983
        %997 = vmatpush.msra.mxu0 %v982
        %998 = vmatpush.msra.mxu0 %v981
        %999 = vmatpush.msra.mxu0 %v980
        %1000 = vmatmul.f32.gmra.mxu0 %v234
        %v1001 = vpop.f32.mrf.mxu0
        %v1002 = vadd.f32 0.0, %v1001
        %1003 = vmatmul.f32.gmra.mxu0 %v237
        %v1004 = vpop.f32.mrf.mxu0
        %v1005 = vadd.f32 0.0, %v1004
        %1006 = vdwg.mxu0
        %s1007 = scalar_lea.vmem %s3, 96
        %v1008 = vld [vmem:[%s1007] sm:$0xff]
        %v1009 = vld [vmem:[%s1007 + $0x8] sm:$0xff]
        %v1010 = vld [vmem:[%s1007 + $0x10] sm:$0xff]
        %v1011 = vld [vmem:[%s1007 + $0x18] sm:$0xff]
        %1012 = vmatpush.msra.mxu0 0.0
        %1013 = vmatpush.msra.mxu0 0.0
        %1014 = vmatpush.msra.mxu0 0.0
        %1015 = vmatpush.msra.mxu0 0.0
        %1016 = vmatpush.msra.mxu0 0.0
        %1017 = vmatpush.msra.mxu0 0.0
        %1018 = vmatpush.msra.mxu0 0.0
        %1019 = vmatpush.msra.mxu0 0.0
        %1020 = vmatpush.msra.mxu0 0.0
        %1021 = vmatpush.msra.mxu0 0.0
        %1022 = vmatpush.msra.mxu0 0.0
        %1023 = vmatpush.msra.mxu0 0.0
        %1024 = vmatpush.msra.mxu0 %v1011
        %1025 = vmatpush.msra.mxu0 %v1010
        %1026 = vmatpush.msra.mxu0 %v1009
        %1027 = vmatpush.msra.mxu0 %v1008
        %1028 = vmatmul.f32.gmra.mxu0 %v234
        %v1029 = vpop.f32.mrf.mxu0
        %v1030 = vadd.f32 0.0, %v1029
        %1031 = vmatmul.f32.gmra.mxu0 %v237
        %v1032 = vpop.f32.mrf.mxu0
        %v1033 = vadd.f32 0.0, %v1032
        %1034 = vdwg.mxu0
        %v1036 = vsel %vm316, %v974, 0
        %v1039 = vsel %vm316, %v1002, 0
        %1041 = vmatpush.xpose.msra.mxu0 0.0
        %1042 = vmatpush.xpose.msra.mxu0 0.0
        %1043 = vmatpush.xpose.msra.mxu0 0.0
        %1044 = vmatpush.xpose.msra.mxu0 0.0
        %1045 = vmatpush.xpose.msra.mxu0 0.0
        %1046 = vmatpush.xpose.msra.mxu0 0.0
        %1047 = vmatpush.xpose.msra.mxu0 0.0
        %1048 = vmatpush.xpose.msra.mxu0 0.0
        %1049 = vmatpush.xpose.msra.mxu0 0.0
        %1050 = vmatpush.xpose.msra.mxu0 0.0
        %1051 = vmatpush.xpose.msra.mxu0 0.0
        %1052 = vmatpush.xpose.msra.mxu0 0.0
        %1053 = vmatpush.xpose.msra.mxu0 0.0
        %1054 = vmatpush.xpose.msra.mxu0 0.0
        %1055 = vmatpush.xpose.msra.mxu0 0.0
        %1056 = vmatpush.xpose.msra.mxu0 %v1039
        %1057 = vmatmul.f32.gmra.mxu0 %v1036
        %v1058 = vpop.f32.mrf.mxu0
        %v1059 = vadd.f32 0.0, %v1058
        %1060 = vdwg.mxu0
        %v1062 = vsel %vm316, %v977, 0
        %v1065 = vsel %vm316, %v1005, 0
        %1067 = vmatpush.xpose.msra.mxu0 0.0
        %1068 = vmatpush.xpose.msra.mxu0 0.0
        %1069 = vmatpush.xpose.msra.mxu0 0.0
        %1070 = vmatpush.xpose.msra.mxu0 0.0
        %1071 = vmatpush.xpose.msra.mxu0 0.0
        %1072 = vmatpush.xpose.msra.mxu0 0.0
        %1073 = vmatpush.xpose.msra.mxu0 0.0
        %1074 = vmatpush.xpose.msra.mxu0 0.0
        %1075 = vmatpush.xpose.msra.mxu0 0.0
        %1076 = vmatpush.xpose.msra.mxu0 0.0
        %1077 = vmatpush.xpose.msra.mxu0 0.0
        %1078 = vmatpush.xpose.msra.mxu0 0.0
        %1079 = vmatpush.xpose.msra.mxu0 0.0
        %1080 = vmatpush.xpose.msra.mxu0 0.0
        %1081 = vmatpush.xpose.msra.mxu0 0.0
        %1082 = vmatpush.xpose.msra.mxu0 %v1065
        %1083 = vmatmul.f32.gmra.mxu0 %v1062
        %v1084 = vpop.f32.mrf.mxu0
        %v1085 = vadd.f32 0.0, %v1084
        %1086 = vdwg.mxu0
        %v1087 = vsel %vm316, %v1059, -inf
        %1088 = vmax.xlane.f32.xlu0 %v1087
        %v1089 = vpop.xlane.xlu0 %1088
        %v1090 = vsel %vm316, %v1085, -inf
        %1091 = vmax.xlane.f32.xlu0 %v1090
        %v1092 = vpop.xlane.xlu0 %1091
        %v1093 = vsub.f32 %v1059, %v1089
        %v1094 = vsub.f32 %v1085, %v1092
        %v1095 = vmul.f32 %v1093, 1.442695
        %v1096 = vpow.pop %v1095
        %v1097 = vmul.f32 %v1094, 1.442695
        %v1098 = vpow.pop %v1097
        %v1099 = vsel %vm316, %v1096, 0.0
        %1100 = vadd.xlane.f32.xlu0 %v1099
        %v1101 = vpop.xlane.xlu0 %1100
        %v1102 = vsel %vm316, %v1098, 0.0
        %1103 = vadd.xlane.f32.xlu0 %v1102
        %v1104 = vpop.xlane.xlu0 %1103
        %v1105 = vrcp.pop %v1101
        %v1106 = vrcp.pop %v1104
        %v1107 = vmul.f32 %v1096, %v1105
        %v1108 = vmul.f32 %v1098, %v1106
        %v1110 = vsel %vm316, %v1107, 0
        %1112 = vmatpush.msra.mxu0 0.0
        %1113 = vmatpush.msra.mxu0 0.0
        %1114 = vmatpush.msra.mxu0 0.0
        %1115 = vmatpush.msra.mxu0 0.0
        %1116 = vmatpush.msra.mxu0 0.0
        %1117 = vmatpush.msra.mxu0 0.0
        %1118 = vmatpush.msra.mxu0 0.0
        %1119 = vmatpush.msra.mxu0 0.0
        %1120 = vmatpush.msra.mxu0 0.0
        %1121 = vmatpush.msra.mxu0 0.0
        %1122 = vmatpush.msra.mxu0 0.0
        %1123 = vmatpush.msra.mxu0 0.0
        %1124 = vmatpush.msra.mxu0 0.0
        %1125 = vmatpush.msra.mxu0 0.0
        %1126 = vmatpush.msra.mxu0 0.0
        %1127 = vmatpush.msra.mxu0 %v1030
        %1128 = vmatmul.f32.gmra.mxu0 %v1110
        %v1129 = vpop.f32.mrf.mxu0
        %v1130 = vadd.f32 0.0, %v1129
        %1131 = vdwg.mxu0
        %v1133 = vsel %vm316, %v1108, 0
        %1135 = vmatpush.msra.mxu0 0.0
        %1136 = vmatpush.msra.mxu0 0.0
        %1137 = vmatpush.msra.mxu0 0.0
        %1138 = vmatpush.msra.mxu0 0.0
        %1139 = vmatpush.msra.mxu0 0.0
        %1140 = vmatpush.msra.mxu0 0.0
        %1141 = vmatpush.msra.mxu0 0.0
        %1142 = vmatpush.msra.mxu0 0.0
        %1143 = vmatpush.msra.mxu0 0.0
        %1144 = vmatpush.msra.mxu0 0.0
        %1145 = vmatpush.msra.mxu0 0.0
        %1146 = vmatpush.msra.mxu0 0.0
        %1147 = vmatpush.msra.mxu0 0.0
        %1148 = vmatpush.msra.mxu0 0.0
        %1149 = vmatpush.msra.mxu0 0.0
        %1150 = vmatpush.msra.mxu0 %v1033
        %1151 = vmatmul.f32.gmra.mxu0 %v1133
        %v1152 = vpop.f32.mrf.mxu0
        %v1153 = vadd.f32 0.0, %v1152
        %1154 = vdwg.mxu0
        %s1155 = scalar_lea.vmem %s4, 24
        %v1156 = vld [vmem:[%s1155] sm:$0xff]
        %v1158 = vsel %vm316, %v1130, 0
        %v1161 = vsel %vm316, %v1153, 0
        %1163 = vmatpush.msra.mxu0 0.0
        %1164 = vmatpush.msra.mxu0 0.0
        %1165 = vmatpush.msra.mxu0 0.0
        %1166 = vmatpush.msra.mxu0 0.0
        %1167 = vmatpush.msra.mxu0 0.0
        %1168 = vmatpush.msra.mxu0 0.0
        %1169 = vmatpush.msra.mxu0 0.0
        %1170 = vmatpush.msra.mxu0 0.0
        %1171 = vmatpush.msra.mxu0 0.0
        %1172 = vmatpush.msra.mxu0 0.0
        %1173 = vmatpush.msra.mxu0 0.0
        %1174 = vmatpush.msra.mxu0 0.0
        %1175 = vmatpush.msra.mxu0 0.0
        %1176 = vmatpush.msra.mxu0 0.0
        %1177 = vmatpush.msra.mxu0 0.0
        %1178 = vmatpush.msra.mxu0 %v1156
        %1179 = vmatmul.f32.gmra.mxu0 %v1158
        %v1180 = vpop.f32.mrf.mxu0
        %v1181 = vadd.f32 0.0, %v1180
        %1182 = vmatmul.f32.gmra.mxu0 %v1161
        %v1183 = vpop.f32.mrf.mxu0
        %v1184 = vadd.f32 0.0, %v1183
        %1185 = vdwg.mxu0
        %v1186 = vld [vmem:[#allocation2] sm:$0xff]
        %v1187 = vld [vmem:[#allocation2 + $0x8] sm:$0xff]
        %v1188 = vadd.f32 %v1186, %v1181
        %v1189 = vadd.f32 %v1187, %v1184
        %1190 = vst.msk [vmem:[#allocation2] sm:$0xff] %vm232, %v1188
        %1191 = vst.msk [vmem:[#allocation2 + $0x8] sm:$0xff] %vm232, %v1189
        %v1192 = vld [vmem:[#allocation2] sm:$0xff]
        %v1193 = vld [vmem:[#allocation2 + $0x8] sm:$0xff]
        %1194 = vst.msk [vmem:[%s218] sm:$0xff] %vm232, %v1192
        %1195 = vst.msk [vmem:[%s218 + $0x8] sm:$0xff] %vm232, %v1193
        %s1196 = sand.u32 %s137, 1
        %s1197 = scalar_lea.sflag [#allocation4], %s1196
        %s1198 = sand.u32 %s137, 1
        %s1199 = smul.addr %s1198, 16
        %s1200 = scalar_lea.vmem [#allocation3], %s1199
        // Predicated region
        $region41: #{tpu_custom_call.1} parent=39 // pred_check
          %p1201 = pneg %p147
        $region42: #{tpu_custom_call.1} parent=39 // pred_check_branch
          %1203 = sbr.rel (%p1201) target = $region44
        $region43: #{tpu_custom_call.1} parent=39 // pred_region
          %s1204 = smul.u32 2, %s19
          %1206 = vsyncadd %s1197, 0
          %s1207 = smul.addr %s1204, 8
          %s1208 = scalar_lea.hbm %s5, %s1207
          %s1209 = sshll.u32 %s1200, 4
          %s1210 = int_to_ptr.vmem [resolvable:$true] %s1209
          %s1211 = sshll.u32 %s1208, 4
          %s1212 = int_to_ptr.hbm [resolvable:$true] %s1211
          %1217 = dma.vmem_to_hbm [thread:$0]  %s1210, 256, %s1212, %s1197, 128, 128, 8
        $region44: #{tpu_custom_call.1} parent=39 // pred_fallthru
          _
      $region40: #{tpu_custom_call.1} parent=5 // pred_fallthru
        _
      %p1218 = scmp.le.s32.totalorder 2, %s14
      // Predicated region
      $region45: #{tpu_custom_call.1} parent=5 // pred_check
        %p1219 = pneg %p1218
      $region46: #{tpu_custom_call.1} parent=5 // pred_check_branch
        %1221 = sbr.rel (%p1219) target = $region48
      $region47: #{tpu_custom_call.1} parent=5 // pred_region
        %s1222 = ssub.s32 %s14, 2
        // Predicated region
        $region49: #{tpu_custom_call.1} parent=47 // pred_check
          %p1223 = pneg %p153
        $region50: #{tpu_custom_call.1} parent=47 // pred_check_branch
          %1225 = sbr.rel (%p1223) target = $region52
        $region51: #{tpu_custom_call.1} parent=47 // pred_region
          %s1226 = sand.u32 %s138, 1
          %s1227 = scalar_lea.sflag [#allocation4], %s1226
          %s1228 = sand.u32 %s138, 1
          %s1229 = smul.addr %s1228, 16
          %s1230 = scalar_lea.vmem [#allocation3], %s1229
          %1232 = dma.done %s1227, 256
        $region52: #{tpu_custom_call.1} parent=47 // pred_fallthru
          _
      $region48: #{tpu_custom_call.1} parent=5 // pred_fallthru
        _
    $region6: #{tpu_custom_call.1} parent=1 // loop_footer
      %s18 = sadd.s32 1, %s14
    $region7: #{tpu_custom_call.1} parent=1 // loop_footer_branch
      %13 = sbr.rel target = $region3
    $region8: #{tpu_custom_call.1} parent=1 // loop_exit
      _
    %1233 = vsyncpa [#allocation4], 1
    %s1234 = scalar_lea.sflag [#allocation4], 1
    %1235 = vsyncpa %s1234, 1

</llo_original>
